<compile_context>
chip_gen: v7x
topology: tpu7x:2x2x1
jax: 0.10.0
libtpu: 0.0.40
codegen_flags: <defaults>
</compile_context>

<pallas_src>
import functools

import jax
import jax.numpy as jnp
from jax import lax
from jax.experimental import pallas as pl
from jax.experimental.pallas import tpu as pltpu


def _round_up(x, m):
    return ((x + m - 1) // m) * m


def _mha_kernel(num_views, eps, compute_dtype,
                resid_ref, k_ref, v_ref, q_ref, wq_ref, wf_ref, b_ref, out_ref):
    """Fused multi-view attention + final linear + residual + LayerNorm.

    Operands (per grid step over batch tiles of size TB):
      resid_ref : [TB, DV]      f32  residual rows (raw `value`), batch-tiled
      k_ref     : [B, DK]       cdt  projected keys, zero-padded D..DK, resident
      v_ref     : [B, DVP]      cdt  projected values, zero-padded DV..DVP, resident
      q_ref     : [H, TB, DQP]  cdt  raw queries + 1.0 bias column, batch-tiled
      wq_ref    : [H, DQP, DK]  cdt  per-view W_q (scale + bias folded in), resident
      wf_ref    : [H*DVP, DV]   cdt  linear_final rows, zero rows at pad offsets
      b_ref     : [8, DV]       f32  rows = [bf, gamma, beta, 0, ...]
    """
    f32 = jnp.float32
    cdt = compute_dtype
    H = num_views

    bf = b_ref[0:1, :]
    gamma = b_ref[1:2, :]
    beta = b_ref[2:3, :]

    k = k_ref[...]                                   # [B, DK]
    v = v_ref[...]                                   # [B, DVP]

    # Per-view attention.  All matmuls accumulate in f32 on the MXU.
    ctxs = []
    for i in range(H):
        # Query projection; attention scale and bias are folded into wq_ref.
        q = jnp.dot(q_ref[i], wq_ref[i], preferred_element_type=f32)        # [TB, DK]
        # Scores without materializing k.T: contract the last dims directly.
        s = lax.dot_general(q.astype(cdt), k,
                            dimension_numbers=(((1,), (1,)), ((), ())),
                            preferred_element_type=f32)                     # [TB, B]
        s = s - jnp.max(s, axis=-1, keepdims=True)
        p = jnp.exp(s)
        p = p * pl.reciprocal(jnp.sum(p, axis=-1, keepdims=True), approx=True)
        ctxs.append(jnp.dot(p.astype(cdt), v, preferred_element_type=f32))  # [TB, DVP]

    # Single K = H*DVP matmul for linear_final (one MXU accumulation chain
    # instead of H matmuls + H-1 VALU adds).  The concat is 128-lane aligned
    # because each per-head context block is padded to DVP.
    ctx_all = jnp.concatenate(ctxs, axis=-1) if H > 1 else ctxs[0]          # [TB, H*DVP]
    att = jnp.dot(ctx_all.astype(cdt), wf_ref[...],
                  preferred_element_type=f32)                               # [TB, DV]

    # Residual + LayerNorm (dropout p=0 -> identity).  Elementwise math in f32.
    out = resid_ref[...] + att + bf
    mean = jnp.mean(out, axis=-1, keepdims=True)
    var = jnp.mean((out - mean) ** 2, axis=-1, keepdims=True)
    out_ref[...] = ((out - mean) * lax.rsqrt(var + eps)) * gamma + beta


def prepare_mha_params(params, *, num_heads, model_dim, view_feature_list,
                       compute_dtype=jnp.float32):
    """One-time parameter packing (hoisted out of the per-call path)."""
    f32 = jnp.float32
    cdt = compute_dtype
    H, D = num_heads, model_dim
    DV = (H + 1) * D
    DK = _round_up(D, 128)                               # lane-dense q / k width
    DVP = _round_up(DV, 128)                             # aligned per-head ctx stride
    DQP = _round_up(max(view_feature_list) + 1, 128)     # +1 for the bias column
    scale = float((D // H) ** (-0.5))                    # key flattens to model_dim

    # Per-view query weights: bias folded as an augmented row, scale folded in.
    wq_stack = jnp.zeros((H, DQP, DK), f32)
    for i, (wq, bq) in enumerate(params["q_layers"]):
        fi = wq.shape[0]
        wq_stack = wq_stack.at[i, :fi, :D].set(wq.astype(f32) * scale)
        wq_stack = wq_stack.at[i, fi, :D].set(bq.reshape(-1).astype(f32) * scale)
    wq_stack = wq_stack.astype(cdt)

    # linear_final: one row block per head at stride DVP (zero rows at the
    # pad offsets so the padded ctx columns contribute nothing).
    wf = params["wf"].astype(f32)
    wf_pack = jnp.zeros((H * DVP, DV), f32)
    for i in range(H):
        wf_pack = wf_pack.at[i * DVP:i * DVP + DV, :].set(wf[i * DV:(i + 1) * DV, :])
    wf_pack = wf_pack.astype(cdt)

    # Final bias + LayerNorm affine in one sublane-aligned [8, DV] slab.
    bias_pack = jnp.zeros((8, DV), f32)
    bias_pack = bias_pack.at[0, :].set(params["bf"].reshape(-1).astype(f32))
    bias_pack = bias_pack.at[1, :].set(params["gamma"].reshape(-1).astype(f32))
    bias_pack = bias_pack.at[2, :].set(params["beta"].reshape(-1).astype(f32))

    return dict(
        wk=params["wk"].astype(f32), bk=params["bk"].astype(f32),
        wv=params["wv"].astype(f32), bv=params["bv"].astype(f32),
        wq_stack=wq_stack, wf_pack=wf_pack, bias_pack=bias_pack,
        num_heads=H, model_dim=D, dv=DV, dk=DK, dvp=DVP, dqp=DQP,
        compute_dtype=cdt,
    )


def multi_head_attention(key, value, queries, prepared, *, block_b=None):
    """Per-call wrapper: packs the query slab, projects k/v once, runs the kernel."""
    f32 = jnp.float32
    cdt = prepared["compute_dtype"]
    H = prepared["num_heads"]
    D = prepared["model_dim"]
    DV, DK, DVP, DQP = (prepared["dv"], prepared["dk"],
                        prepared["dvp"], prepared["dqp"])
    B = key.shape[0]
    eps = float((H + 1) * D)        # faithful to the PyTorch source (see NOTE)

    # k / v projections computed once here (tiny XLA matmuls) instead of once
    # per grid step inside the kernel; padded to lane-dense widths.
    k_proj = key.astype(f32) @ prepared["wk"] + prepared["bk"]       # [B, D]
    v_proj = value.astype(f32) @ prepared["wv"] + prepared["bv"]     # [B, DV]
    k_pad = jnp.pad(k_proj, ((0, 0), (0, DK - D))).astype(cdt)       # [B, DK]
    v_pad = jnp.pad(v_proj, ((0, 0), (0, DVP - DV))).astype(cdt)     # [B, DVP]

    # Query slab [H, B, DQP] in compute dtype with an augmented 1.0 bias column.
    q_rows = []
    for q in queries:
        fi = q.shape[1]
        q_rows.append(jnp.concatenate(
            [q.astype(cdt), jnp.ones((B, 1), cdt),
             jnp.zeros((B, DQP - fi - 1), cdt)], axis=1))
    q_stack = jnp.stack(q_rows, axis=0)

    # Batch tile: >= 2 "parallel" grid steps when B allows, so v7x's second
    # TensorCore gets work; sublane aligned (multiple of 8) and divides B.
    if block_b is not None:
        TB = block_b
    elif B >= 16 and B % 16 == 0:
        TB = B // 2
    else:
        TB = B
    if B % TB != 0 or TB % 8 != 0:
        TB = B
    n_tiles = B // TB

    kernel = functools.partial(_mha_kernel, H, eps, cdt)

    return pl.pallas_call(
        kernel,
        out_shape=jax.ShapeDtypeStruct((B, DV), f32),
        grid=(n_tiles,),
        in_specs=[
            pl.BlockSpec((TB, DV), lambda i: (i, 0)),          # residual  (tiled)
            pl.BlockSpec((B, DK), lambda i: (0, 0)),           # k_proj    (resident)
            pl.BlockSpec((B, DVP), lambda i: (0, 0)),          # v_proj    (resident)
            pl.BlockSpec((H, TB, DQP), lambda i: (0, i, 0)),   # queries   (tiled)
            pl.BlockSpec((H, DQP, DK), lambda i: (0, 0, 0)),   # wq_stack  (resident)
            pl.BlockSpec((H * DVP, DV), lambda i: (0, 0)),     # wf_pack   (resident)
            pl.BlockSpec((8, DV), lambda i: (0, 0)),           # bias_pack (resident)
        ],
        out_specs=pl.BlockSpec((TB, DV), lambda i: (i, 0)),
        compiler_params=pltpu.CompilerParams(
            dimension_semantics=("parallel",),
            vmem_limit_bytes=32 * 1024 * 1024),
    )(value.astype(f32), k_pad, v_pad, q_stack,
      prepared["wq_stack"], prepared["wf_pack"], prepared["bias_pack"])


def _reference(key, value, queries, params, *, num_heads, model_dim):
    scale = (model_dim // num_heads) ** (-0.5)
    eps = float((num_heads + 1) * model_dim)
    k = key @ params["wk"] + params["bk"]
    v = value @ params["wv"] + params["bv"]
    ctxs = []
    for (wq, bq), q_in in zip(params["q_layers"], queries):
        q = q_in @ wq + bq
        p = jax.nn.softmax((q @ k.T) * scale, axis=-1)
        ctxs.append(p @ v)
    att = jnp.concatenate(ctxs, axis=1)
    out = value + (att @ params["wf"] + params["bf"])
    mean = out.mean(-1, keepdims=True)
    var = ((out - mean) ** 2).mean(-1, keepdims=True)
    return (out - mean) / jnp.sqrt(var + eps) * params["gamma"] + params["beta"]


def _init_linear(rng, fan_in, fan_out):
    kw, kb = jax.random.split(rng)
    bound = 1.0 / (fan_in ** 0.5)
    w = jax.random.uniform(kw, (fan_in, fan_out), jnp.float32, -bound, bound)
    b = jax.random.uniform(kb, (1, fan_out), jnp.float32, -bound, bound)
    return w, b


if __name__ == "__main__":
    B, D, H = 8, 32, 4                       # batch, model_dim, num_heads
    view_feature_list = [16, 24, 32, 40]     # one view per head
    DV = (H + 1) * D                         # 160

    root = jax.random.PRNGKey(0)
    keys = jax.random.split(root, 16)

    # Deterministic synthetic parameters.
    wk, bk = _init_linear(keys[0], D, D)
    wv, bv = _init_linear(keys[1], DV, DV)
    q_layers = [_init_linear(keys[2 + i], view_feature_list[i], D)
                for i in range(H)]
    wf, bf = _init_linear(keys[6], H * DV, DV)
    params = dict(wk=wk, bk=bk, wv=wv, bv=bv, q_layers=q_layers, wf=wf, bf=bf,
                  gamma=jnp.ones((1, DV), jnp.float32),
                  beta=jnp.zeros((1, DV), jnp.float32))

    # Deterministic inputs.
    key_in = jax.random.normal(keys[7], (B, D), jnp.float32)
    value_in = jax.random.normal(keys[8], (B, DV), jnp.float32)
    queries = [jax.random.normal(keys[9 + i], (B, view_feature_list[i]), jnp.float32)
               for i in range(H)]

    ref = _reference(key_in, value_in, queries, params, num_heads=H, model_dim=D)

    # f32 MXU-operand path (reference-accurate; approx reciprocal/rsqrt only).
    prepared_f32 = prepare_mha_params(params, num_heads=H, model_dim=D,
                                      view_feature_list=view_feature_list)
    out = multi_head_attention(key_in, value_in, queries, prepared_f32)
    out = jax.block_until_ready(out)
    assert out.shape == (B, DV)
    assert jnp.allclose(out, ref, rtol=1e-3, atol=1e-3), "f32 path mismatch vs reference"

    # bf16 MXU-operand path (beneficial on all generations incl. v5e; softmax /
    # LayerNorm / residual math stays f32).
    prepared_bf16 = prepare_mha_params(params, num_heads=H, model_dim=D,
                                       view_feature_list=view_feature_list,
                                       compute_dtype=jnp.bfloat16)
    out_bf16 = multi_head_attention(key_in, value_in, queries, prepared_bf16)
    out_bf16 = jax.block_until_ready(out_bf16)
    assert jnp.allclose(out_bf16, ref, rtol=5e-2, atol=5e-2), "bf16 path mismatch vs reference"

    print("KERNEL_OK")
</pallas_src>

<mosaic_0001>
module attributes {stable_mosaic.version = 11 : i64} {
  func.func @_mha_kernel(%arg0: i32, %arg1: memref<8x160xf32, #tpu.memory_space<vmem>>, %arg2: memref<8x128xf32, #tpu.memory_space<vmem>>, %arg3: memref<8x256xf32, #tpu.memory_space<vmem>>, %arg4: memref<4x8x128xf32, #tpu.memory_space<vmem>>, %arg5: memref<4x128x128xf32, #tpu.memory_space<vmem>>, %arg6: memref<1024x160xf32, #tpu.memory_space<vmem>>, %arg7: memref<8x160xf32, #tpu.memory_space<vmem>>, %arg8: memref<8x160xf32, #tpu.memory_space<vmem>>) attributes {dimension_semantics = [#tpu.dimension_semantics<parallel>], iteration_bounds = array<i64: 1>, scalar_prefetch = 0 : i64, scratch_operands = 0 : i64, tpu.core_type = #tpu.core_type<tc>, window_params = [{transform_indices = @transform_0, window_bounds = array<i64: 8, 160>}, {pipeline_mode = #tpu.pipeline_mode<synchronous>, transform_indices = @transform_1, window_bounds = array<i64: 8, 128>}, {pipeline_mode = #tpu.pipeline_mode<synchronous>, transform_indices = @transform_2, window_bounds = array<i64: 8, 256>}, {transform_indices = @transform_3, window_bounds = array<i64: 4, 8, 128>}, {pipeline_mode = #tpu.pipeline_mode<synchronous>, transform_indices = @transform_4, window_bounds = array<i64: 4, 128, 128>}, {pipeline_mode = #tpu.pipeline_mode<synchronous>, transform_indices = @transform_5, window_bounds = array<i64: 1024, 160>}, {pipeline_mode = #tpu.pipeline_mode<synchronous>, transform_indices = @transform_6, window_bounds = array<i64: 8, 160>}, {transform_indices = @transform_7, window_bounds = array<i64: 8, 160>}]} {
    %c0 = arith.constant 0 : index
    %c0_0 = arith.constant 0 : index
    %0 = vector.load %arg7[%c0, %c0_0] : memref<8x160xf32, #tpu.memory_space<vmem>>, vector<1x160xf32>
    %c1 = arith.constant 1 : index
    %c0_1 = arith.constant 0 : index
    %1 = vector.load %arg7[%c1, %c0_1] : memref<8x160xf32, #tpu.memory_space<vmem>>, vector<1x160xf32>
    %c2 = arith.constant 2 : index
    %c0_2 = arith.constant 0 : index
    %2 = vector.load %arg7[%c2, %c0_2] : memref<8x160xf32, #tpu.memory_space<vmem>>, vector<1x160xf32>
    %c0_3 = arith.constant 0 : index
    %c0_4 = arith.constant 0 : index
    %3 = vector.load %arg2[%c0_3, %c0_4] : memref<8x128xf32, #tpu.memory_space<vmem>>, vector<8x128xf32>
    %c0_5 = arith.constant 0 : index
    %c0_6 = arith.constant 0 : index
    %4 = vector.load %arg3[%c0_5, %c0_6] : memref<8x256xf32, #tpu.memory_space<vmem>>, vector<8x256xf32>
    %c0_7 = arith.constant 0 : index
    %c0_8 = arith.constant 0 : index
    %c0_9 = arith.constant 0 : index
    %5 = vector.load %arg4[%c0_7, %c0_8, %c0_9] : memref<4x8x128xf32, #tpu.memory_space<vmem>>, vector<1x8x128xf32>
    %6 = vector.shape_cast %5 : vector<1x8x128xf32> to vector<8x128xf32>
    %c0_10 = arith.constant 0 : index
    %c0_11 = arith.constant 0 : index
    %c0_12 = arith.constant 0 : index
    %7 = vector.load %arg5[%c0_10, %c0_11, %c0_12] : memref<4x128x128xf32, #tpu.memory_space<vmem>>, vector<1x128x128xf32>
    %8 = vector.shape_cast %7 : vector<1x128x128xf32> to vector<128x128xf32>
    %cst = arith.constant dense<0.000000e+00> : vector<8x128xf32>
    %9 = tpu.matmul %6, %8, %cst {dimension_numbers = #tpu.dot_dimension_numbers<[1], [0], [0], [1], [0, 0, 1, 1], [], []>} : vector<8x128xf32>, vector<128x128xf32>, vector<8x128xf32> -> vector<8x128xf32>
    %cst_13 = arith.constant dense<0.000000e+00> : vector<8x8xf32>
    %10 = tpu.matmul %9, %3, %cst_13 {dimension_numbers = #tpu.dot_dimension_numbers<[1], [1], [0], [0], [0, 0, 1, 0], [], []>} : vector<8x128xf32>, vector<8x128xf32>, vector<8x8xf32> -> vector<8x8xf32>
    %cst_14 = arith.constant dense<0xFF800000> : vector<8xf32>
    %11 = vector.multi_reduction <maximumf>, %10, %cst_14 [1] : vector<8x8xf32> to vector<8xf32>
    %12 = vector.shape_cast %11 : vector<8xf32> to vector<8x1xf32>
    %13 = vector.broadcast %12 : vector<8x1xf32> to vector<8x8xf32>
    %14 = arith.subf %10, %13 : vector<8x8xf32>
    %15 = math.exp %14 : vector<8x8xf32>
    %cst_15 = arith.constant dense<0.000000e+00> : vector<8xf32>
    %16 = vector.multi_reduction <add>, %15, %cst_15 [1] : vector<8x8xf32> to vector<8xf32>
    %17 = vector.shape_cast %16 : vector<8xf32> to vector<8x1xf32>
    %18 = tpu.reciprocal %17 {approx = true} : vector<8x1xf32> -> vector<8x1xf32>
    %19 = vector.broadcast %18 : vector<8x1xf32> to vector<8x8xf32>
    %20 = arith.mulf %15, %19 : vector<8x8xf32>
    %cst_16 = arith.constant dense<0.000000e+00> : vector<8x256xf32>
    %21 = tpu.matmul %20, %4, %cst_16 {dimension_numbers = #tpu.dot_dimension_numbers<[1], [0], [0], [1], [0, 0, 1, 1], [], []>} : vector<8x8xf32>, vector<8x256xf32>, vector<8x256xf32> -> vector<8x256xf32>
    %c1_17 = arith.constant 1 : index
    %c0_18 = arith.constant 0 : index
    %c0_19 = arith.constant 0 : index
    %22 = vector.load %arg4[%c1_17, %c0_18, %c0_19] : memref<4x8x128xf32, #tpu.memory_space<vmem>>, vector<1x8x128xf32>
    %23 = vector.shape_cast %22 : vector<1x8x128xf32> to vector<8x128xf32>
    %c1_20 = arith.constant 1 : index
    %c0_21 = arith.constant 0 : index
    %c0_22 = arith.constant 0 : index
    %24 = vector.load %arg5[%c1_20, %c0_21, %c0_22] : memref<4x128x128xf32, #tpu.memory_space<vmem>>, vector<1x128x128xf32>
    %25 = vector.shape_cast %24 : vector<1x128x128xf32> to vector<128x128xf32>
    %cst_23 = arith.constant dense<0.000000e+00> : vector<8x128xf32>
    %26 = tpu.matmul %23, %25, %cst_23 {dimension_numbers = #tpu.dot_dimension_numbers<[1], [0], [0], [1], [0, 0, 1, 1], [], []>} : vector<8x128xf32>, vector<128x128xf32>, vector<8x128xf32> -> vector<8x128xf32>
    %cst_24 = arith.constant dense<0.000000e+00> : vector<8x8xf32>
    %27 = tpu.matmul %26, %3, %cst_24 {dimension_numbers = #tpu.dot_dimension_numbers<[1], [1], [0], [0], [0, 0, 1, 0], [], []>} : vector<8x128xf32>, vector<8x128xf32>, vector<8x8xf32> -> vector<8x8xf32>
    %cst_25 = arith.constant dense<0xFF800000> : vector<8xf32>
    %28 = vector.multi_reduction <maximumf>, %27, %cst_25 [1] : vector<8x8xf32> to vector<8xf32>
    %29 = vector.shape_cast %28 : vector<8xf32> to vector<8x1xf32>
    %30 = vector.broadcast %29 : vector<8x1xf32> to vector<8x8xf32>
    %31 = arith.subf %27, %30 : vector<8x8xf32>
    %32 = math.exp %31 : vector<8x8xf32>
    %cst_26 = arith.constant dense<0.000000e+00> : vector<8xf32>
    %33 = vector.multi_reduction <add>, %32, %cst_26 [1] : vector<8x8xf32> to vector<8xf32>
    %34 = vector.shape_cast %33 : vector<8xf32> to vector<8x1xf32>
    %35 = tpu.reciprocal %34 {approx = true} : vector<8x1xf32> -> vector<8x1xf32>
    %36 = vector.broadcast %35 : vector<8x1xf32> to vector<8x8xf32>
    %37 = arith.mulf %32, %36 : vector<8x8xf32>
    %cst_27 = arith.constant dense<0.000000e+00> : vector<8x256xf32>
    %38 = tpu.matmul %37, %4, %cst_27 {dimension_numbers = #tpu.dot_dimension_numbers<[1], [0], [0], [1], [0, 0, 1, 1], [], []>} : vector<8x8xf32>, vector<8x256xf32>, vector<8x256xf32> -> vector<8x256xf32>
    %c2_28 = arith.constant 2 : index
    %c0_29 = arith.constant 0 : index
    %c0_30 = arith.constant 0 : index
    %39 = vector.load %arg4[%c2_28, %c0_29, %c0_30] : memref<4x8x128xf32, #tpu.memory_space<vmem>>, vector<1x8x128xf32>
    %40 = vector.shape_cast %39 : vector<1x8x128xf32> to vector<8x128xf32>
    %c2_31 = arith.constant 2 : index
    %c0_32 = arith.constant 0 : index
    %c0_33 = arith.constant 0 : index
    %41 = vector.load %arg5[%c2_31, %c0_32, %c0_33] : memref<4x128x128xf32, #tpu.memory_space<vmem>>, vector<1x128x128xf32>
    %42 = vector.shape_cast %41 : vector<1x128x128xf32> to vector<128x128xf32>
    %cst_34 = arith.constant dense<0.000000e+00> : vector<8x128xf32>
    %43 = tpu.matmul %40, %42, %cst_34 {dimension_numbers = #tpu.dot_dimension_numbers<[1], [0], [0], [1], [0, 0, 1, 1], [], []>} : vector<8x128xf32>, vector<128x128xf32>, vector<8x128xf32> -> vector<8x128xf32>
    %cst_35 = arith.constant dense<0.000000e+00> : vector<8x8xf32>
    %44 = tpu.matmul %43, %3, %cst_35 {dimension_numbers = #tpu.dot_dimension_numbers<[1], [1], [0], [0], [0, 0, 1, 0], [], []>} : vector<8x128xf32>, vector<8x128xf32>, vector<8x8xf32> -> vector<8x8xf32>
    %cst_36 = arith.constant dense<0xFF800000> : vector<8xf32>
    %45 = vector.multi_reduction <maximumf>, %44, %cst_36 [1] : vector<8x8xf32> to vector<8xf32>
    %46 = vector.shape_cast %45 : vector<8xf32> to vector<8x1xf32>
    %47 = vector.broadcast %46 : vector<8x1xf32> to vector<8x8xf32>
    %48 = arith.subf %44, %47 : vector<8x8xf32>
    %49 = math.exp %48 : vector<8x8xf32>
    %cst_37 = arith.constant dense<0.000000e+00> : vector<8xf32>
    %50 = vector.multi_reduction <add>, %49, %cst_37 [1] : vector<8x8xf32> to vector<8xf32>
    %51 = vector.shape_cast %50 : vector<8xf32> to vector<8x1xf32>
    %52 = tpu.reciprocal %51 {approx = true} : vector<8x1xf32> -> vector<8x1xf32>
    %53 = vector.broadcast %52 : vector<8x1xf32> to vector<8x8xf32>
    %54 = arith.mulf %49, %53 : vector<8x8xf32>
    %cst_38 = arith.constant dense<0.000000e+00> : vector<8x256xf32>
    %55 = tpu.matmul %54, %4, %cst_38 {dimension_numbers = #tpu.dot_dimension_numbers<[1], [0], [0], [1], [0, 0, 1, 1], [], []>} : vector<8x8xf32>, vector<8x256xf32>, vector<8x256xf32> -> vector<8x256xf32>
    %c3 = arith.constant 3 : index
    %c0_39 = arith.constant 0 : index
    %c0_40 = arith.constant 0 : index
    %56 = vector.load %arg4[%c3, %c0_39, %c0_40] : memref<4x8x128xf32, #tpu.memory_space<vmem>>, vector<1x8x128xf32>
    %57 = vector.shape_cast %56 : vector<1x8x128xf32> to vector<8x128xf32>
    %c3_41 = arith.constant 3 : index
    %c0_42 = arith.constant 0 : index
    %c0_43 = arith.constant 0 : index
    %58 = vector.load %arg5[%c3_41, %c0_42, %c0_43] : memref<4x128x128xf32, #tpu.memory_space<vmem>>, vector<1x128x128xf32>
    %59 = vector.shape_cast %58 : vector<1x128x128xf32> to vector<128x128xf32>
    %cst_44 = arith.constant dense<0.000000e+00> : vector<8x128xf32>
    %60 = tpu.matmul %57, %59, %cst_44 {dimension_numbers = #tpu.dot_dimension_numbers<[1], [0], [0], [1], [0, 0, 1, 1], [], []>} : vector<8x128xf32>, vector<128x128xf32>, vector<8x128xf32> -> vector<8x128xf32>
    %cst_45 = arith.constant dense<0.000000e+00> : vector<8x8xf32>
    %61 = tpu.matmul %60, %3, %cst_45 {dimension_numbers = #tpu.dot_dimension_numbers<[1], [1], [0], [0], [0, 0, 1, 0], [], []>} : vector<8x128xf32>, vector<8x128xf32>, vector<8x8xf32> -> vector<8x8xf32>
    %cst_46 = arith.constant dense<0xFF800000> : vector<8xf32>
    %62 = vector.multi_reduction <maximumf>, %61, %cst_46 [1] : vector<8x8xf32> to vector<8xf32>
    %63 = vector.shape_cast %62 : vector<8xf32> to vector<8x1xf32>
    %64 = vector.broadcast %63 : vector<8x1xf32> to vector<8x8xf32>
    %65 = arith.subf %61, %64 : vector<8x8xf32>
    %66 = math.exp %65 : vector<8x8xf32>
    %cst_47 = arith.constant dense<0.000000e+00> : vector<8xf32>
    %67 = vector.multi_reduction <add>, %66, %cst_47 [1] : vector<8x8xf32> to vector<8xf32>
    %68 = vector.shape_cast %67 : vector<8xf32> to vector<8x1xf32>
    %69 = tpu.reciprocal %68 {approx = true} : vector<8x1xf32> -> vector<8x1xf32>
    %70 = vector.broadcast %69 : vector<8x1xf32> to vector<8x8xf32>
    %71 = arith.mulf %66, %70 : vector<8x8xf32>
    %cst_48 = arith.constant dense<0.000000e+00> : vector<8x256xf32>
    %72 = tpu.matmul %71, %4, %cst_48 {dimension_numbers = #tpu.dot_dimension_numbers<[1], [0], [0], [1], [0, 0, 1, 1], [], []>} : vector<8x8xf32>, vector<8x256xf32>, vector<8x256xf32> -> vector<8x256xf32>
    %73 = tpu.concatenate %21, %38, %55, %72 in 1 : vector<8x256xf32>, vector<8x256xf32>, vector<8x256xf32>, vector<8x256xf32> -> vector<8x1024xf32>
    %c0_49 = arith.constant 0 : index
    %c0_50 = arith.constant 0 : index
    %74 = vector.load %arg6[%c0_49, %c0_50] : memref<1024x160xf32, #tpu.memory_space<vmem>>, vector<1024x160xf32>
    %cst_51 = arith.constant dense<0.000000e+00> : vector<8x160xf32>
    %75 = tpu.matmul %73, %74, %cst_51 {dimension_numbers = #tpu.dot_dimension_numbers<[1], [0], [0], [1], [0, 0, 1, 1], [], []>} : vector<8x1024xf32>, vector<1024x160xf32>, vector<8x160xf32> -> vector<8x160xf32>
    %c0_52 = arith.constant 0 : index
    %c0_53 = arith.constant 0 : index
    %76 = vector.load %arg1[%c0_52, %c0_53] : memref<8x160xf32, #tpu.memory_space<vmem>>, vector<8x160xf32>
    %77 = arith.addf %76, %75 : vector<8x160xf32>
    %78 = vector.broadcast %0 : vector<1x160xf32> to vector<8x160xf32>
    %79 = arith.addf %77, %78 : vector<8x160xf32>
    %cst_54 = arith.constant dense<0.000000e+00> : vector<8xf32>
    %80 = vector.multi_reduction <add>, %79, %cst_54 [1] : vector<8x160xf32> to vector<8xf32>
    %81 = vector.shape_cast %80 : vector<8xf32> to vector<8x1xf32>
    %cst_55 = arith.constant 1.600000e+02 : f32
    %82 = vector.broadcast %cst_55 : f32 to vector<8x1xf32>
    %83 = arith.divf %81, %82 : vector<8x1xf32>
    %84 = vector.broadcast %83 : vector<8x1xf32> to vector<8x160xf32>
    %85 = arith.subf %79, %84 : vector<8x160xf32>
    %86 = arith.mulf %85, %85 : vector<8x160xf32>
    %cst_56 = arith.constant dense<0.000000e+00> : vector<8xf32>
    %87 = vector.multi_reduction <add>, %86, %cst_56 [1] : vector<8x160xf32> to vector<8xf32>
    %88 = vector.shape_cast %87 : vector<8xf32> to vector<8x1xf32>
    %cst_57 = arith.constant 1.600000e+02 : f32
    %89 = vector.broadcast %cst_57 : f32 to vector<8x1xf32>
    %90 = arith.divf %88, %89 : vector<8x1xf32>
    %91 = vector.broadcast %83 : vector<8x1xf32> to vector<8x160xf32>
    %92 = arith.subf %79, %91 : vector<8x160xf32>
    %cst_58 = arith.constant 1.600000e+02 : f32
    %93 = vector.broadcast %cst_58 : f32 to vector<8x1xf32>
    %94 = arith.addf %90, %93 : vector<8x1xf32>
    %95 = math.rsqrt %94 : vector<8x1xf32>
    %96 = vector.broadcast %95 : vector<8x1xf32> to vector<8x160xf32>
    %97 = arith.mulf %92, %96 : vector<8x160xf32>
    %98 = vector.broadcast %1 : vector<1x160xf32> to vector<8x160xf32>
    %99 = arith.mulf %97, %98 : vector<8x160xf32>
    %100 = vector.broadcast %2 : vector<1x160xf32> to vector<8x160xf32>
    %101 = arith.addf %99, %100 : vector<8x160xf32>
    %c0_59 = arith.constant 0 : index
    %c0_60 = arith.constant 0 : index
    %102 = vector.load %arg8[%c0_59, %c0_60] : memref<8x160xf32, #tpu.memory_space<vmem>>, vector<8x160xf32>
    tpu.vector_store %arg8[%c0_59, %c0_60], %101 {strides = array<i32>} : memref<8x160xf32, #tpu.memory_space<vmem>>, vector<8x160xf32>,
    return
  }
  func.func @transform_0(%arg0: i32) -> (i32, i32) {
    %c0_i32 = arith.constant 0 : i32
    %c0_i32_0 = arith.constant 0 : i32
    return %arg0, %c0_i32 : i32, i32
  }
  func.func @transform_1(%arg0: i32) -> (i32, i32) {
    %c0_i32 = arith.constant 0 : i32
    %c0_i32_0 = arith.constant 0 : i32
    %c0_i32_1 = arith.constant 0 : i32
    return %c0_i32, %c0_i32_0 : i32, i32
  }
  func.func @transform_2(%arg0: i32) -> (i32, i32) {
    %c0_i32 = arith.constant 0 : i32
    %c0_i32_0 = arith.constant 0 : i32
    %c0_i32_1 = arith.constant 0 : i32
    return %c0_i32, %c0_i32_0 : i32, i32
  }
  func.func @transform_3(%arg0: i32) -> (i32, i32, i32) {
    %c0_i32 = arith.constant 0 : i32
    %c0_i32_0 = arith.constant 0 : i32
    %c0_i32_1 = arith.constant 0 : i32
    return %c0_i32, %arg0, %c0_i32_0 : i32, i32, i32
  }
  func.func @transform_4(%arg0: i32) -> (i32, i32, i32) {
    %c0_i32 = arith.constant 0 : i32
    %c0_i32_0 = arith.constant 0 : i32
    %c0_i32_1 = arith.constant 0 : i32
    %c0_i32_2 = arith.constant 0 : i32
    return %c0_i32, %c0_i32_0, %c0_i32_1 : i32, i32, i32
  }
  func.func @transform_5(%arg0: i32) -> (i32, i32) {
    %c0_i32 = arith.constant 0 : i32
    %c0_i32_0 = arith.constant 0 : i32
    %c0_i32_1 = arith.constant 0 : i32
    return %c0_i32, %c0_i32_0 : i32, i32
  }
  func.func @transform_6(%arg0: i32) -> (i32, i32) {
    %c0_i32 = arith.constant 0 : i32
    %c0_i32_0 = arith.constant 0 : i32
    %c0_i32_1 = arith.constant 0 : i32
    return %c0_i32, %c0_i32_0 : i32, i32
  }
  func.func @transform_7(%arg0: i32) -> (i32, i32) {
    %c0_i32 = arith.constant 0 : i32
    %c0_i32_0 = arith.constant 0 : i32
    return %arg0, %c0_i32 : i32, i32
  }
}

</mosaic_0001>

<llo_original>
// kernel: tpu_custom_call.1
$region0: #{tpu_custom_call.1}
  #allocation0 [shape = 'u32[]', space=smem, size = 0x4, offset = 0x4, fixed_abs, tag = 'smem constant byte address 0x4 - core index']
  #allocation1 [shape = 'u32[144,128]{1,0:T(1,128)}', space=vmem, size = 0x12000, scoped, tag = 'internal scratch']
  %s0 = inlined_call_operand.vmem [shape: f32[8,160], index: 0, kind: input, shape index: {}]
  %s1 = inlined_call_operand.vmem [shape: f32[8,128], index: 1, kind: input, shape index: {}]
  %s2 = inlined_call_operand.vmem [shape: f32[8,256], index: 2, kind: input, shape index: {}]
  %s3 = inlined_call_operand.vmem [shape: f32[4,8,128], index: 3, kind: input, shape index: {}]
  %s4 = inlined_call_operand.vmem [shape: f32[4,128,128], index: 4, kind: input, shape index: {}]
  %s5 = inlined_call_operand.vmem [shape: f32[1024,160], index: 5, kind: input, shape index: {}]
  %s6 = inlined_call_operand.vmem [shape: f32[8,160], index: 6, kind: input, shape index: {}]
  %s7 = inlined_call_operand.hbm [shape: f32[8,160], index: 7, kind: output, shape index: {}]
  %s8 = sld [smem:[#allocation0]]
  $region38: #{tpu_custom_call.1} parent=0
    _
  %s10 = ssub.s32 1, %s8
  %s11 = scalar_select 0, %s10, %s8
  $region1: #{tpu_custom_call.1} parent=0
    #allocation2 [shape = 'u8[8192]{0}', space=vmem, size = 0x2000, scoped, tag = 'output window, operand 0, single buffered']
    #allocation3 [shape = 's32[1]{0}', space=sflag, size = 0x4, scoped, tag = 'scoped memory for tpu_custom_call.1']
    %12 = vsyncpa [#allocation3], 0
    // Predicated region
    $region2: #{tpu_custom_call.1} parent=1 // pred_check
      _
    $region3: #{tpu_custom_call.1} parent=1 // pred_check_branch
      %14 = sbr.rel (0) target = $region5
    $region4: #{tpu_custom_call.1} parent=1 // pred_region
      _
    $region5: #{tpu_custom_call.1} parent=1 // pred_fallthru
      _
    // Predicated region
    $region6: #{tpu_custom_call.1} parent=1 // pred_check
      _
    $region7: #{tpu_custom_call.1} parent=1 // pred_check_branch
      %16 = sbr.rel (0) target = $region9
    $region8: #{tpu_custom_call.1} parent=1 // pred_region
      _
    $region9: #{tpu_custom_call.1} parent=1 // pred_fallthru
      _
    // Predicated region
    $region10: #{tpu_custom_call.1} parent=1 // pred_check
      _
    $region11: #{tpu_custom_call.1} parent=1 // pred_check_branch
      %18 = sbr.rel (0) target = $region13
    $region12: #{tpu_custom_call.1} parent=1 // pred_region
      _
    $region13: #{tpu_custom_call.1} parent=1 // pred_fallthru
      _
    // Predicated region
    $region14: #{tpu_custom_call.1} parent=1 // pred_check
      _
    $region15: #{tpu_custom_call.1} parent=1 // pred_check_branch
      %20 = sbr.rel (0) target = $region17
    $region16: #{tpu_custom_call.1} parent=1 // pred_region
      _
    $region17: #{tpu_custom_call.1} parent=1 // pred_fallthru
      _
    // Predicated region
    $region18: #{tpu_custom_call.1} parent=1 // pred_check
      _
    $region19: #{tpu_custom_call.1} parent=1 // pred_check_branch
      %22 = sbr.rel (0) target = $region21
    $region20: #{tpu_custom_call.1} parent=1 // pred_region
      _
    $region21: #{tpu_custom_call.1} parent=1 // pred_fallthru
      _
    // Predicated region
    $region22: #{tpu_custom_call.1} parent=1 // pred_check
      _
    $region23: #{tpu_custom_call.1} parent=1 // pred_check_branch
      %24 = sbr.rel (0) target = $region25
    $region24: #{tpu_custom_call.1} parent=1 // pred_region
      _
    $region25: #{tpu_custom_call.1} parent=1 // pred_fallthru
      _
    // Predicated region
    $region26: #{tpu_custom_call.1} parent=1 // pred_check
      _
    $region27: #{tpu_custom_call.1} parent=1 // pred_check_branch
      %26 = sbr.rel (0) target = $region29
    $region28: #{tpu_custom_call.1} parent=1 // pred_region
      _
    $region29: #{tpu_custom_call.1} parent=1 // pred_fallthru
      _
    %v27 = vld [vmem:[%s6] ss:$8 sm:$0x3]
    %s28 = scalar_lea.vmem %s6, 1
    %v29 = vld [vmem:[%s28] ss:$8 sm:$0x3]
    %s30 = scalar_lea.vmem %s6, 2
    %v31 = vld [vmem:[%s30] ss:$8 sm:$0x3]
    %v32 = vld [vmem:[%s1] sm:$0xff]
    %v33 = vld [vmem:[%s2] sm:$0xff]
    %v34 = vld [vmem:[%s2 + $0x8] sm:$0xff]
    %v35 = vld [vmem:[%s3] sm:$0xff]
    %v36 = vld [vmem:[%s4] sm:$0xff]
    %v37 = vld [vmem:[%s4 + $0x8] sm:$0xff]
    %v38 = vld [vmem:[%s4 + $0x10] sm:$0xff]
    %v39 = vld [vmem:[%s4 + $0x18] sm:$0xff]
    %v40 = vld [vmem:[%s4 + $0x20] sm:$0xff]
    %v41 = vld [vmem:[%s4 + $0x28] sm:$0xff]
    %v42 = vld [vmem:[%s4 + $0x30] sm:$0xff]
    %v43 = vld [vmem:[%s4 + $0x38] sm:$0xff]
    %v44 = vld [vmem:[%s4 + $0x40] sm:$0xff]
    %v45 = vld [vmem:[%s4 + $0x48] sm:$0xff]
    %v46 = vld [vmem:[%s4 + $0x50] sm:$0xff]
    %v47 = vld [vmem:[%s4 + $0x58] sm:$0xff]
    %v48 = vld [vmem:[%s4 + $0x60] sm:$0xff]
    %v49 = vld [vmem:[%s4 + $0x68] sm:$0xff]
    %v50 = vld [vmem:[%s4 + $0x70] sm:$0xff]
    %v51 = vld [vmem:[%s4 + $0x78] sm:$0xff]
    %52 = vmatprep.subr.mxu0 0.0
    %53 = vmatpush1.msra.mxu0 %v36
    %54 = vmatprep.subr.mxu0 0.0
    %55 = vmatpush1.msra.mxu0 %v37
    %56 = vmatprep.subr.mxu0 0.0
    %57 = vmatpush1.msra.mxu0 %v38
    %58 = vmatprep.subr.mxu0 0.0
    %59 = vmatpush1.msra.mxu0 %v39
    %60 = vmatprep.subr.mxu0 0.0
    %61 = vmatpush1.msra.mxu0 %v40
    %62 = vmatprep.subr.mxu0 0.0
    %63 = vmatpush1.msra.mxu0 %v41
    %64 = vmatprep.subr.mxu0 0.0
    %65 = vmatpush1.msra.mxu0 %v42
    %66 = vmatprep.subr.mxu0 0.0
    %67 = vmatpush1.msra.mxu0 %v43
    %68 = vmatprep.subr.mxu0 0.0
    %69 = vmatpush1.msra.mxu0 %v44
    %70 = vmatprep.subr.mxu0 0.0
    %71 = vmatpush1.msra.mxu0 %v45
    %72 = vmatprep.subr.mxu0 0.0
    %73 = vmatpush1.msra.mxu0 %v46
    %74 = vmatprep.subr.mxu0 0.0
    %75 = vmatpush1.msra.mxu0 %v47
    %76 = vmatprep.subr.mxu0 0.0
    %77 = vmatpush1.msra.mxu0 %v48
    %78 = vmatprep.subr.mxu0 0.0
    %79 = vmatpush1.msra.mxu0 %v49
    %80 = vmatprep.subr.mxu0 0.0
    %81 = vmatpush1.msra.mxu0 %v50
    %82 = vmatprep.subr.mxu0 0.0
    %83 = vmatpush1.msra.mxu0 %v51
    %84 = vmatprep.subr.mxu0 0.0
    %85 = vmatpush1.msra.mxu0 0.0
    %86 = vmatprep.subr.mxu0 0.0
    %87 = vmatpush1.msra.mxu0 0.0
    %88 = vmatprep.subr.mxu0 0.0
    %89 = vmatpush1.msra.mxu0 0.0
    %90 = vmatprep.subr.mxu0 0.0
    %91 = vmatpush1.msra.mxu0 0.0
    %92 = vmatprep.subr.mxu0 0.0
    %93 = vmatpush1.msra.mxu0 0.0
    %94 = vmatprep.subr.mxu0 0.0
    %95 = vmatpush1.msra.mxu0 0.0
    %96 = vmatprep.subr.mxu0 0.0
    %97 = vmatpush1.msra.mxu0 0.0
    %98 = vmatprep.subr.mxu0 0.0
    %99 = vmatpush1.msra.mxu0 0.0
    %100 = vmatprep.subr.mxu0 0.0
    %101 = vmatpush1.msra.mxu0 0.0
    %102 = vmatprep.subr.mxu0 0.0
    %103 = vmatpush1.msra.mxu0 0.0
    %104 = vmatprep.subr.mxu0 0.0
    %105 = vmatpush1.msra.mxu0 0.0
    %106 = vmatprep.subr.mxu0 0.0
    %107 = vmatpush1.msra.mxu0 0.0
    %108 = vmatprep.subr.mxu0 0.0
    %109 = vmatpush1.msra.mxu0 0.0
    %110 = vmatprep.subr.mxu0 0.0
    %111 = vmatpush1.msra.mxu0 0.0
    %112 = vmatprep.subr.mxu0 0.0
    %113 = vmatpush1.msra.mxu0 0.0
    %114 = vmatprep.subr.mxu0 0.0
    %115 = vmatpush1.msra.mxu0 0.0
    %116 = vmatprep.mubr.f32.mxu0 0.0
    %117 = vmatmul.mubr.f32.gmra.mrb[0].mxu0 %v35
    %v118 = vpop.f32.mrb[0].mxu0
    %v119 = vadd.f32 0.0, %v118
    %v120 = vpop.f32.mrb[0].mxu0
    %121 = vdwg.mxu0
    %122 = vmatprep.subr.mxu0 0.0
    %123 = vmatpush1.xpose.msra.mxu0 %v32
    %124 = vmatprep.subr.mxu0 0.0
    %125 = vmatpush1.xpose.msra.mxu0 0.0
    %126 = vmatprep.subr.mxu0 0.0
    %127 = vmatpush1.xpose.msra.mxu0 0.0
    %128 = vmatprep.subr.mxu0 0.0
    %129 = vmatpush1.xpose.msra.mxu0 0.0
    %130 = vmatprep.subr.mxu0 0.0
    %131 = vmatpush1.xpose.msra.mxu0 0.0
    %132 = vmatprep.subr.mxu0 0.0
    %133 = vmatpush1.xpose.msra.mxu0 0.0
    %134 = vmatprep.subr.mxu0 0.0
    %135 = vmatpush1.xpose.msra.mxu0 0.0
    %136 = vmatprep.subr.mxu0 0.0
    %137 = vmatpush1.xpose.msra.mxu0 0.0
    %138 = vmatprep.subr.mxu0 0.0
    %139 = vmatpush1.xpose.msra.mxu0 0.0
    %140 = vmatprep.subr.mxu0 0.0
    %141 = vmatpush1.xpose.msra.mxu0 0.0
    %142 = vmatprep.subr.mxu0 0.0
    %143 = vmatpush1.xpose.msra.mxu0 0.0
    %144 = vmatprep.subr.mxu0 0.0
    %145 = vmatpush1.xpose.msra.mxu0 0.0
    %146 = vmatprep.subr.mxu0 0.0
    %147 = vmatpush1.xpose.msra.mxu0 0.0
    %148 = vmatprep.subr.mxu0 0.0
    %149 = vmatpush1.xpose.msra.mxu0 0.0
    %150 = vmatprep.subr.mxu0 0.0
    %151 = vmatpush1.xpose.msra.mxu0 0.0
    %152 = vmatprep.subr.mxu0 0.0
    %153 = vmatpush1.xpose.msra.mxu0 0.0
    %154 = vmatprep.subr.mxu0 0.0
    %155 = vmatpush1.xpose.msra.mxu0 0.0
    %156 = vmatprep.subr.mxu0 0.0
    %157 = vmatpush1.xpose.msra.mxu0 0.0
    %158 = vmatprep.subr.mxu0 0.0
    %159 = vmatpush1.xpose.msra.mxu0 0.0
    %160 = vmatprep.subr.mxu0 0.0
    %161 = vmatpush1.xpose.msra.mxu0 0.0
    %162 = vmatprep.subr.mxu0 0.0
    %163 = vmatpush1.xpose.msra.mxu0 0.0
    %164 = vmatprep.subr.mxu0 0.0
    %165 = vmatpush1.xpose.msra.mxu0 0.0
    %166 = vmatprep.subr.mxu0 0.0
    %167 = vmatpush1.xpose.msra.mxu0 0.0
    %168 = vmatprep.subr.mxu0 0.0
    %169 = vmatpush1.xpose.msra.mxu0 0.0
    %170 = vmatprep.subr.mxu0 0.0
    %171 = vmatpush1.xpose.msra.mxu0 0.0
    %172 = vmatprep.subr.mxu0 0.0
    %173 = vmatpush1.xpose.msra.mxu0 0.0
    %174 = vmatprep.subr.mxu0 0.0
    %175 = vmatpush1.xpose.msra.mxu0 0.0
    %176 = vmatprep.subr.mxu0 0.0
    %177 = vmatpush1.xpose.msra.mxu0 0.0
    %178 = vmatprep.subr.mxu0 0.0
    %179 = vmatpush1.xpose.msra.mxu0 0.0
    %180 = vmatprep.subr.mxu0 0.0
    %181 = vmatpush1.xpose.msra.mxu0 0.0
    %182 = vmatprep.subr.mxu0 0.0
    %183 = vmatpush1.xpose.msra.mxu0 0.0
    %184 = vmatprep.subr.mxu0 0.0
    %185 = vmatpush1.xpose.msra.mxu0 0.0
    %186 = vmatprep.mubr.f32.mxu0 0.0
    %187 = vmatmul.mubr.f32.gmra.mrb[0].mxu0 %v119
    %v188 = vpop.f32.mrb[0].mxu0
    %v189 = vadd.f32 0.0, %v188
    %v190 = vpop.f32.mrb[0].mxu0
    %191 = vdwg.mxu0
    %vm192 = vcmask 64512
    %v193 = vsel %vm192, %v189, -inf
    %194 = vmax.xlane.f32.xlu0 %v193
    %v195 = vpop.xlane.xlu0 %194
    %v196 = vsub.f32 %v189, %v195
    %v197 = vmul.f32 %v196, 1.442695
    %v198 = vpow.pop %v197
    %v199 = vsel %vm192, %v198, 0.0
    %200 = vadd.xlane.f32.xlu0 %v199
    %v201 = vpop.xlane.xlu0 %200
    %v202 = vrcp.pop %v201
    %v203 = vmul.f32 %v198, %v202
    %v205 = vsel %vm192, %v203, 0
    %207 = vmatprep.subr.mxu0 %v34
    %208 = vmatpush1.msra.mxu0 %v33
    %209 = vmatprep.subr.mxu0 0.0
    %210 = vmatpush1.msra.mxu0 0.0
    %211 = vmatprep.subr.mxu0 0.0
    %212 = vmatpush1.msra.mxu0 0.0
    %213 = vmatprep.subr.mxu0 0.0
    %214 = vmatpush1.msra.mxu0 0.0
    %215 = vmatprep.subr.mxu0 0.0
    %216 = vmatpush1.msra.mxu0 0.0
    %217 = vmatprep.subr.mxu0 0.0
    %218 = vmatpush1.msra.mxu0 0.0
    %219 = vmatprep.subr.mxu0 0.0
    %220 = vmatpush1.msra.mxu0 0.0
    %221 = vmatprep.subr.mxu0 0.0
    %222 = vmatpush1.msra.mxu0 0.0
    %223 = vmatprep.subr.mxu0 0.0
    %224 = vmatpush1.msra.mxu0 0.0
    %225 = vmatprep.subr.mxu0 0.0
    %226 = vmatpush1.msra.mxu0 0.0
    %227 = vmatprep.subr.mxu0 0.0
    %228 = vmatpush1.msra.mxu0 0.0
    %229 = vmatprep.subr.mxu0 0.0
    %230 = vmatpush1.msra.mxu0 0.0
    %231 = vmatprep.subr.mxu0 0.0
    %232 = vmatpush1.msra.mxu0 0.0
    %233 = vmatprep.subr.mxu0 0.0
    %234 = vmatpush1.msra.mxu0 0.0
    %235 = vmatprep.subr.mxu0 0.0
    %236 = vmatpush1.msra.mxu0 0.0
    %237 = vmatprep.subr.mxu0 0.0
    %238 = vmatpush1.msra.mxu0 0.0
    %239 = vmatprep.subr.mxu0 0.0
    %240 = vmatpush1.msra.mxu0 0.0
    %241 = vmatprep.subr.mxu0 0.0
    %242 = vmatpush1.msra.mxu0 0.0
    %243 = vmatprep.subr.mxu0 0.0
    %244 = vmatpush1.msra.mxu0 0.0
    %245 = vmatprep.subr.mxu0 0.0
    %246 = vmatpush1.msra.mxu0 0.0
    %247 = vmatprep.subr.mxu0 0.0
    %248 = vmatpush1.msra.mxu0 0.0
    %249 = vmatprep.subr.mxu0 0.0
    %250 = vmatpush1.msra.mxu0 0.0
    %251 = vmatprep.subr.mxu0 0.0
    %252 = vmatpush1.msra.mxu0 0.0
    %253 = vmatprep.subr.mxu0 0.0
    %254 = vmatpush1.msra.mxu0 0.0
    %255 = vmatprep.subr.mxu0 0.0
    %256 = vmatpush1.msra.mxu0 0.0
    %257 = vmatprep.subr.mxu0 0.0
    %258 = vmatpush1.msra.mxu0 0.0
    %259 = vmatprep.subr.mxu0 0.0
    %260 = vmatpush1.msra.mxu0 0.0
    %261 = vmatprep.subr.mxu0 0.0
    %262 = vmatpush1.msra.mxu0 0.0
    %263 = vmatprep.subr.mxu0 0.0
    %264 = vmatpush1.msra.mxu0 0.0
    %265 = vmatprep.subr.mxu0 0.0
    %266 = vmatpush1.msra.mxu0 0.0
    %267 = vmatprep.subr.mxu0 0.0
    %268 = vmatpush1.msra.mxu0 0.0
    %269 = vmatprep.subr.mxu0 0.0
    %270 = vmatpush1.msra.mxu0 0.0
    %271 = vmatprep.mubr.f32.mxu0 0.0
    %272 = vmatmul.mubr.f32.gmra.mrb[0].mxu0 %v205
    %v273 = vpop.f32.mrb[0].mxu0
    %v274 = vadd.f32 0.0, %v273
    %v275 = vpop.f32.mrb[0].mxu0
    %v276 = vadd.f32 0.0, %v275
    %277 = vdwg.mxu0
    %s278 = scalar_lea.vmem %s3, 8
    %v279 = vld [vmem:[%s278] sm:$0xff]
    %s280 = scalar_lea.vmem %s4, 128
    %v281 = vld [vmem:[%s280] sm:$0xff]
    %v282 = vld [vmem:[%s280 + $0x8] sm:$0xff]
    %v283 = vld [vmem:[%s280 + $0x10] sm:$0xff]
    %v284 = vld [vmem:[%s280 + $0x18] sm:$0xff]
    %v285 = vld [vmem:[%s280 + $0x20] sm:$0xff]
    %v286 = vld [vmem:[%s280 + $0x28] sm:$0xff]
    %v287 = vld [vmem:[%s280 + $0x30] sm:$0xff]
    %v288 = vld [vmem:[%s280 + $0x38] sm:$0xff]
    %v289 = vld [vmem:[%s280 + $0x40] sm:$0xff]
    %v290 = vld [vmem:[%s280 + $0x48] sm:$0xff]
    %v291 = vld [vmem:[%s280 + $0x50] sm:$0xff]
    %v292 = vld [vmem:[%s280 + $0x58] sm:$0xff]
    %v293 = vld [vmem:[%s280 + $0x60] sm:$0xff]
    %v294 = vld [vmem:[%s280 + $0x68] sm:$0xff]
    %v295 = vld [vmem:[%s280 + $0x70] sm:$0xff]
    %v296 = vld [vmem:[%s280 + $0x78] sm:$0xff]
    %297 = vmatprep.subr.mxu0 0.0
    %298 = vmatpush1.msra.mxu0 %v281
    %299 = vmatprep.subr.mxu0 0.0
    %300 = vmatpush1.msra.mxu0 %v282
    %301 = vmatprep.subr.mxu0 0.0
    %302 = vmatpush1.msra.mxu0 %v283
    %303 = vmatprep.subr.mxu0 0.0
    %304 = vmatpush1.msra.mxu0 %v284
    %305 = vmatprep.subr.mxu0 0.0
    %306 = vmatpush1.msra.mxu0 %v285
    %307 = vmatprep.subr.mxu0 0.0
    %308 = vmatpush1.msra.mxu0 %v286
    %309 = vmatprep.subr.mxu0 0.0
    %310 = vmatpush1.msra.mxu0 %v287
    %311 = vmatprep.subr.mxu0 0.0
    %312 = vmatpush1.msra.mxu0 %v288
    %313 = vmatprep.subr.mxu0 0.0
    %314 = vmatpush1.msra.mxu0 %v289
    %315 = vmatprep.subr.mxu0 0.0
    %316 = vmatpush1.msra.mxu0 %v290
    %317 = vmatprep.subr.mxu0 0.0
    %318 = vmatpush1.msra.mxu0 %v291
    %319 = vmatprep.subr.mxu0 0.0
    %320 = vmatpush1.msra.mxu0 %v292
    %321 = vmatprep.subr.mxu0 0.0
    %322 = vmatpush1.msra.mxu0 %v293
    %323 = vmatprep.subr.mxu0 0.0
    %324 = vmatpush1.msra.mxu0 %v294
    %325 = vmatprep.subr.mxu0 0.0
    %326 = vmatpush1.msra.mxu0 %v295
    %327 = vmatprep.subr.mxu0 0.0
    %328 = vmatpush1.msra.mxu0 %v296
    %329 = vmatprep.subr.mxu0 0.0
    %330 = vmatpush1.msra.mxu0 0.0
    %331 = vmatprep.subr.mxu0 0.0
    %332 = vmatpush1.msra.mxu0 0.0
    %333 = vmatprep.subr.mxu0 0.0
    %334 = vmatpush1.msra.mxu0 0.0
    %335 = vmatprep.subr.mxu0 0.0
    %336 = vmatpush1.msra.mxu0 0.0
    %337 = vmatprep.subr.mxu0 0.0
    %338 = vmatpush1.msra.mxu0 0.0
    %339 = vmatprep.subr.mxu0 0.0
    %340 = vmatpush1.msra.mxu0 0.0
    %341 = vmatprep.subr.mxu0 0.0
    %342 = vmatpush1.msra.mxu0 0.0
    %343 = vmatprep.subr.mxu0 0.0
    %344 = vmatpush1.msra.mxu0 0.0
    %345 = vmatprep.subr.mxu0 0.0
    %346 = vmatpush1.msra.mxu0 0.0
    %347 = vmatprep.subr.mxu0 0.0
    %348 = vmatpush1.msra.mxu0 0.0
    %349 = vmatprep.subr.mxu0 0.0
    %350 = vmatpush1.msra.mxu0 0.0
    %351 = vmatprep.subr.mxu0 0.0
    %352 = vmatpush1.msra.mxu0 0.0
    %353 = vmatprep.subr.mxu0 0.0
    %354 = vmatpush1.msra.mxu0 0.0
    %355 = vmatprep.subr.mxu0 0.0
    %356 = vmatpush1.msra.mxu0 0.0
    %357 = vmatprep.subr.mxu0 0.0
    %358 = vmatpush1.msra.mxu0 0.0
    %359 = vmatprep.subr.mxu0 0.0
    %360 = vmatpush1.msra.mxu0 0.0
    %361 = vmatprep.mubr.f32.mxu0 0.0
    %362 = vmatmul.mubr.f32.gmra.mrb[0].mxu0 %v279
    %v363 = vpop.f32.mrb[0].mxu0
    %v364 = vadd.f32 0.0, %v363
    %v365 = vpop.f32.mrb[0].mxu0
    %366 = vdwg.mxu0
    %367 = vmatprep.subr.mxu0 0.0
    %368 = vmatpush1.xpose.msra.mxu0 %v32
    %369 = vmatprep.subr.mxu0 0.0
    %370 = vmatpush1.xpose.msra.mxu0 0.0
    %371 = vmatprep.subr.mxu0 0.0
    %372 = vmatpush1.xpose.msra.mxu0 0.0
    %373 = vmatprep.subr.mxu0 0.0
    %374 = vmatpush1.xpose.msra.mxu0 0.0
    %375 = vmatprep.subr.mxu0 0.0
    %376 = vmatpush1.xpose.msra.mxu0 0.0
    %377 = vmatprep.subr.mxu0 0.0
    %378 = vmatpush1.xpose.msra.mxu0 0.0
    %379 = vmatprep.subr.mxu0 0.0
    %380 = vmatpush1.xpose.msra.mxu0 0.0
    %381 = vmatprep.subr.mxu0 0.0
    %382 = vmatpush1.xpose.msra.mxu0 0.0
    %383 = vmatprep.subr.mxu0 0.0
    %384 = vmatpush1.xpose.msra.mxu0 0.0
    %385 = vmatprep.subr.mxu0 0.0
    %386 = vmatpush1.xpose.msra.mxu0 0.0
    %387 = vmatprep.subr.mxu0 0.0
    %388 = vmatpush1.xpose.msra.mxu0 0.0
    %389 = vmatprep.subr.mxu0 0.0
    %390 = vmatpush1.xpose.msra.mxu0 0.0
    %391 = vmatprep.subr.mxu0 0.0
    %392 = vmatpush1.xpose.msra.mxu0 0.0
    %393 = vmatprep.subr.mxu0 0.0
    %394 = vmatpush1.xpose.msra.mxu0 0.0
    %395 = vmatprep.subr.mxu0 0.0
    %396 = vmatpush1.xpose.msra.mxu0 0.0
    %397 = vmatprep.subr.mxu0 0.0
    %398 = vmatpush1.xpose.msra.mxu0 0.0
    %399 = vmatprep.subr.mxu0 0.0
    %400 = vmatpush1.xpose.msra.mxu0 0.0
    %401 = vmatprep.subr.mxu0 0.0
    %402 = vmatpush1.xpose.msra.mxu0 0.0
    %403 = vmatprep.subr.mxu0 0.0
    %404 = vmatpush1.xpose.msra.mxu0 0.0
    %405 = vmatprep.subr.mxu0 0.0
    %406 = vmatpush1.xpose.msra.mxu0 0.0
    %407 = vmatprep.subr.mxu0 0.0
    %408 = vmatpush1.xpose.msra.mxu0 0.0
    %409 = vmatprep.subr.mxu0 0.0
    %410 = vmatpush1.xpose.msra.mxu0 0.0
    %411 = vmatprep.subr.mxu0 0.0
    %412 = vmatpush1.xpose.msra.mxu0 0.0
    %413 = vmatprep.subr.mxu0 0.0
    %414 = vmatpush1.xpose.msra.mxu0 0.0
    %415 = vmatprep.subr.mxu0 0.0
    %416 = vmatpush1.xpose.msra.mxu0 0.0
    %417 = vmatprep.subr.mxu0 0.0
    %418 = vmatpush1.xpose.msra.mxu0 0.0
    %419 = vmatprep.subr.mxu0 0.0
    %420 = vmatpush1.xpose.msra.mxu0 0.0
    %421 = vmatprep.subr.mxu0 0.0
    %422 = vmatpush1.xpose.msra.mxu0 0.0
    %423 = vmatprep.subr.mxu0 0.0
    %424 = vmatpush1.xpose.msra.mxu0 0.0
    %425 = vmatprep.subr.mxu0 0.0
    %426 = vmatpush1.xpose.msra.mxu0 0.0
    %427 = vmatprep.subr.mxu0 0.0
    %428 = vmatpush1.xpose.msra.mxu0 0.0
    %429 = vmatprep.subr.mxu0 0.0
    %430 = vmatpush1.xpose.msra.mxu0 0.0
    %431 = vmatprep.mubr.f32.mxu0 0.0
    %432 = vmatmul.mubr.f32.gmra.mrb[0].mxu0 %v364
    %v433 = vpop.f32.mrb[0].mxu0
    %v434 = vadd.f32 0.0, %v433
    %v435 = vpop.f32.mrb[0].mxu0
    %436 = vdwg.mxu0
    %v437 = vsel %vm192, %v434, -inf
    %438 = vmax.xlane.f32.xlu0 %v437
    %v439 = vpop.xlane.xlu0 %438
    %v440 = vsub.f32 %v434, %v439
    %v441 = vmul.f32 %v440, 1.442695
    %v442 = vpow.pop %v441
    %v443 = vsel %vm192, %v442, 0.0
    %444 = vadd.xlane.f32.xlu0 %v443
    %v445 = vpop.xlane.xlu0 %444
    %v446 = vrcp.pop %v445
    %v447 = vmul.f32 %v442, %v446
    %v449 = vsel %vm192, %v447, 0
    %451 = vmatprep.subr.mxu0 %v34
    %452 = vmatpush1.msra.mxu0 %v33
    %453 = vmatprep.subr.mxu0 0.0
    %454 = vmatpush1.msra.mxu0 0.0
    %455 = vmatprep.subr.mxu0 0.0
    %456 = vmatpush1.msra.mxu0 0.0
    %457 = vmatprep.subr.mxu0 0.0
    %458 = vmatpush1.msra.mxu0 0.0
    %459 = vmatprep.subr.mxu0 0.0
    %460 = vmatpush1.msra.mxu0 0.0
    %461 = vmatprep.subr.mxu0 0.0
    %462 = vmatpush1.msra.mxu0 0.0
    %463 = vmatprep.subr.mxu0 0.0
    %464 = vmatpush1.msra.mxu0 0.0
    %465 = vmatprep.subr.mxu0 0.0
    %466 = vmatpush1.msra.mxu0 0.0
    %467 = vmatprep.subr.mxu0 0.0
    %468 = vmatpush1.msra.mxu0 0.0
    %469 = vmatprep.subr.mxu0 0.0
    %470 = vmatpush1.msra.mxu0 0.0
    %471 = vmatprep.subr.mxu0 0.0
    %472 = vmatpush1.msra.mxu0 0.0
    %473 = vmatprep.subr.mxu0 0.0
    %474 = vmatpush1.msra.mxu0 0.0
    %475 = vmatprep.subr.mxu0 0.0
    %476 = vmatpush1.msra.mxu0 0.0
    %477 = vmatprep.subr.mxu0 0.0
    %478 = vmatpush1.msra.mxu0 0.0
    %479 = vmatprep.subr.mxu0 0.0
    %480 = vmatpush1.msra.mxu0 0.0
    %481 = vmatprep.subr.mxu0 0.0
    %482 = vmatpush1.msra.mxu0 0.0
    %483 = vmatprep.subr.mxu0 0.0
    %484 = vmatpush1.msra.mxu0 0.0
    %485 = vmatprep.subr.mxu0 0.0
    %486 = vmatpush1.msra.mxu0 0.0
    %487 = vmatprep.subr.mxu0 0.0
    %488 = vmatpush1.msra.mxu0 0.0
    %489 = vmatprep.subr.mxu0 0.0
    %490 = vmatpush1.msra.mxu0 0.0
    %491 = vmatprep.subr.mxu0 0.0
    %492 = vmatpush1.msra.mxu0 0.0
    %493 = vmatprep.subr.mxu0 0.0
    %494 = vmatpush1.msra.mxu0 0.0
    %495 = vmatprep.subr.mxu0 0.0
    %496 = vmatpush1.msra.mxu0 0.0
    %497 = vmatprep.subr.mxu0 0.0
    %498 = vmatpush1.msra.mxu0 0.0
    %499 = vmatprep.subr.mxu0 0.0
    %500 = vmatpush1.msra.mxu0 0.0
    %501 = vmatprep.subr.mxu0 0.0
    %502 = vmatpush1.msra.mxu0 0.0
    %503 = vmatprep.subr.mxu0 0.0
    %504 = vmatpush1.msra.mxu0 0.0
    %505 = vmatprep.subr.mxu0 0.0
    %506 = vmatpush1.msra.mxu0 0.0
    %507 = vmatprep.subr.mxu0 0.0
    %508 = vmatpush1.msra.mxu0 0.0
    %509 = vmatprep.subr.mxu0 0.0
    %510 = vmatpush1.msra.mxu0 0.0
    %511 = vmatprep.subr.mxu0 0.0
    %512 = vmatpush1.msra.mxu0 0.0
    %513 = vmatprep.subr.mxu0 0.0
    %514 = vmatpush1.msra.mxu0 0.0
    %515 = vmatprep.mubr.f32.mxu0 0.0
    %516 = vmatmul.mubr.f32.gmra.mrb[0].mxu0 %v449
    %v517 = vpop.f32.mrb[0].mxu0
    %v518 = vadd.f32 0.0, %v517
    %v519 = vpop.f32.mrb[0].mxu0
    %v520 = vadd.f32 0.0, %v519
    %521 = vdwg.mxu0
    %s522 = scalar_lea.vmem %s3, 16
    %v523 = vld [vmem:[%s522] sm:$0xff]
    %s524 = scalar_lea.vmem %s4, 256
    %v525 = vld [vmem:[%s524] sm:$0xff]
    %v526 = vld [vmem:[%s524 + $0x8] sm:$0xff]
    %v527 = vld [vmem:[%s524 + $0x10] sm:$0xff]
    %v528 = vld [vmem:[%s524 + $0x18] sm:$0xff]
    %v529 = vld [vmem:[%s524 + $0x20] sm:$0xff]
    %v530 = vld [vmem:[%s524 + $0x28] sm:$0xff]
    %v531 = vld [vmem:[%s524 + $0x30] sm:$0xff]
    %v532 = vld [vmem:[%s524 + $0x38] sm:$0xff]
    %v533 = vld [vmem:[%s524 + $0x40] sm:$0xff]
    %v534 = vld [vmem:[%s524 + $0x48] sm:$0xff]
    %v535 = vld [vmem:[%s524 + $0x50] sm:$0xff]
    %v536 = vld [vmem:[%s524 + $0x58] sm:$0xff]
    %v537 = vld [vmem:[%s524 + $0x60] sm:$0xff]
    %v538 = vld [vmem:[%s524 + $0x68] sm:$0xff]
    %v539 = vld [vmem:[%s524 + $0x70] sm:$0xff]
    %v540 = vld [vmem:[%s524 + $0x78] sm:$0xff]
    %541 = vmatprep.subr.mxu0 0.0
    %542 = vmatpush1.msra.mxu0 %v525
    %543 = vmatprep.subr.mxu0 0.0
    %544 = vmatpush1.msra.mxu0 %v526
    %545 = vmatprep.subr.mxu0 0.0
    %546 = vmatpush1.msra.mxu0 %v527
    %547 = vmatprep.subr.mxu0 0.0
    %548 = vmatpush1.msra.mxu0 %v528
    %549 = vmatprep.subr.mxu0 0.0
    %550 = vmatpush1.msra.mxu0 %v529
    %551 = vmatprep.subr.mxu0 0.0
    %552 = vmatpush1.msra.mxu0 %v530
    %553 = vmatprep.subr.mxu0 0.0
    %554 = vmatpush1.msra.mxu0 %v531
    %555 = vmatprep.subr.mxu0 0.0
    %556 = vmatpush1.msra.mxu0 %v532
    %557 = vmatprep.subr.mxu0 0.0
    %558 = vmatpush1.msra.mxu0 %v533
    %559 = vmatprep.subr.mxu0 0.0
    %560 = vmatpush1.msra.mxu0 %v534
    %561 = vmatprep.subr.mxu0 0.0
    %562 = vmatpush1.msra.mxu0 %v535
    %563 = vmatprep.subr.mxu0 0.0
    %564 = vmatpush1.msra.mxu0 %v536
    %565 = vmatprep.subr.mxu0 0.0
    %566 = vmatpush1.msra.mxu0 %v537
    %567 = vmatprep.subr.mxu0 0.0
    %568 = vmatpush1.msra.mxu0 %v538
    %569 = vmatprep.subr.mxu0 0.0
    %570 = vmatpush1.msra.mxu0 %v539
    %571 = vmatprep.subr.mxu0 0.0
    %572 = vmatpush1.msra.mxu0 %v540
    %573 = vmatprep.subr.mxu0 0.0
    %574 = vmatpush1.msra.mxu0 0.0
    %575 = vmatprep.subr.mxu0 0.0
    %576 = vmatpush1.msra.mxu0 0.0
    %577 = vmatprep.subr.mxu0 0.0
    %578 = vmatpush1.msra.mxu0 0.0
    %579 = vmatprep.subr.mxu0 0.0
    %580 = vmatpush1.msra.mxu0 0.0
    %581 = vmatprep.subr.mxu0 0.0
    %582 = vmatpush1.msra.mxu0 0.0
    %583 = vmatprep.subr.mxu0 0.0
    %584 = vmatpush1.msra.mxu0 0.0
    %585 = vmatprep.subr.mxu0 0.0
    %586 = vmatpush1.msra.mxu0 0.0
    %587 = vmatprep.subr.mxu0 0.0
    %588 = vmatpush1.msra.mxu0 0.0
    %589 = vmatprep.subr.mxu0 0.0
    %590 = vmatpush1.msra.mxu0 0.0
    %591 = vmatprep.subr.mxu0 0.0
    %592 = vmatpush1.msra.mxu0 0.0
    %593 = vmatprep.subr.mxu0 0.0
    %594 = vmatpush1.msra.mxu0 0.0
    %595 = vmatprep.subr.mxu0 0.0
    %596 = vmatpush1.msra.mxu0 0.0
    %597 = vmatprep.subr.mxu0 0.0
    %598 = vmatpush1.msra.mxu0 0.0
    %599 = vmatprep.subr.mxu0 0.0
    %600 = vmatpush1.msra.mxu0 0.0
    %601 = vmatprep.subr.mxu0 0.0
    %602 = vmatpush1.msra.mxu0 0.0
    %603 = vmatprep.subr.mxu0 0.0
    %604 = vmatpush1.msra.mxu0 0.0
    %605 = vmatprep.mubr.f32.mxu0 0.0
    %606 = vmatmul.mubr.f32.gmra.mrb[0].mxu0 %v523
    %v607 = vpop.f32.mrb[0].mxu0
    %v608 = vadd.f32 0.0, %v607
    %v609 = vpop.f32.mrb[0].mxu0
    %610 = vdwg.mxu0
    %611 = vmatprep.subr.mxu0 0.0
    %612 = vmatpush1.xpose.msra.mxu0 %v32
    %613 = vmatprep.subr.mxu0 0.0
    %614 = vmatpush1.xpose.msra.mxu0 0.0
    %615 = vmatprep.subr.mxu0 0.0
    %616 = vmatpush1.xpose.msra.mxu0 0.0
    %617 = vmatprep.subr.mxu0 0.0
    %618 = vmatpush1.xpose.msra.mxu0 0.0
    %619 = vmatprep.subr.mxu0 0.0
    %620 = vmatpush1.xpose.msra.mxu0 0.0
    %621 = vmatprep.subr.mxu0 0.0
    %622 = vmatpush1.xpose.msra.mxu0 0.0
    %623 = vmatprep.subr.mxu0 0.0
    %624 = vmatpush1.xpose.msra.mxu0 0.0
    %625 = vmatprep.subr.mxu0 0.0
    %626 = vmatpush1.xpose.msra.mxu0 0.0
    %627 = vmatprep.subr.mxu0 0.0
    %628 = vmatpush1.xpose.msra.mxu0 0.0
    %629 = vmatprep.subr.mxu0 0.0
    %630 = vmatpush1.xpose.msra.mxu0 0.0
    %631 = vmatprep.subr.mxu0 0.0
    %632 = vmatpush1.xpose.msra.mxu0 0.0
    %633 = vmatprep.subr.mxu0 0.0
    %634 = vmatpush1.xpose.msra.mxu0 0.0
    %635 = vmatprep.subr.mxu0 0.0
    %636 = vmatpush1.xpose.msra.mxu0 0.0
    %637 = vmatprep.subr.mxu0 0.0
    %638 = vmatpush1.xpose.msra.mxu0 0.0
    %639 = vmatprep.subr.mxu0 0.0
    %640 = vmatpush1.xpose.msra.mxu0 0.0
    %641 = vmatprep.subr.mxu0 0.0
    %642 = vmatpush1.xpose.msra.mxu0 0.0
    %643 = vmatprep.subr.mxu0 0.0
    %644 = vmatpush1.xpose.msra.mxu0 0.0
    %645 = vmatprep.subr.mxu0 0.0
    %646 = vmatpush1.xpose.msra.mxu0 0.0
    %647 = vmatprep.subr.mxu0 0.0
    %648 = vmatpush1.xpose.msra.mxu0 0.0
    %649 = vmatprep.subr.mxu0 0.0
    %650 = vmatpush1.xpose.msra.mxu0 0.0
    %651 = vmatprep.subr.mxu0 0.0
    %652 = vmatpush1.xpose.msra.mxu0 0.0
    %653 = vmatprep.subr.mxu0 0.0
    %654 = vmatpush1.xpose.msra.mxu0 0.0
    %655 = vmatprep.subr.mxu0 0.0
    %656 = vmatpush1.xpose.msra.mxu0 0.0
    %657 = vmatprep.subr.mxu0 0.0
    %658 = vmatpush1.xpose.msra.mxu0 0.0
    %659 = vmatprep.subr.mxu0 0.0
    %660 = vmatpush1.xpose.msra.mxu0 0.0
    %661 = vmatprep.subr.mxu0 0.0
    %662 = vmatpush1.xpose.msra.mxu0 0.0
    %663 = vmatprep.subr.mxu0 0.0
    %664 = vmatpush1.xpose.msra.mxu0 0.0
    %665 = vmatprep.subr.mxu0 0.0
    %666 = vmatpush1.xpose.msra.mxu0 0.0
    %667 = vmatprep.subr.mxu0 0.0
    %668 = vmatpush1.xpose.msra.mxu0 0.0
    %669 = vmatprep.subr.mxu0 0.0
    %670 = vmatpush1.xpose.msra.mxu0 0.0
    %671 = vmatprep.subr.mxu0 0.0
    %672 = vmatpush1.xpose.msra.mxu0 0.0
    %673 = vmatprep.subr.mxu0 0.0
    %674 = vmatpush1.xpose.msra.mxu0 0.0
    %675 = vmatprep.mubr.f32.mxu0 0.0
    %676 = vmatmul.mubr.f32.gmra.mrb[0].mxu0 %v608
    %v677 = vpop.f32.mrb[0].mxu0
    %v678 = vadd.f32 0.0, %v677
    %v679 = vpop.f32.mrb[0].mxu0
    %680 = vdwg.mxu0
    %v681 = vsel %vm192, %v678, -inf
    %682 = vmax.xlane.f32.xlu0 %v681
    %v683 = vpop.xlane.xlu0 %682
    %v684 = vsub.f32 %v678, %v683
    %v685 = vmul.f32 %v684, 1.442695
    %v686 = vpow.pop %v685
    %v687 = vsel %vm192, %v686, 0.0
    %688 = vadd.xlane.f32.xlu0 %v687
    %v689 = vpop.xlane.xlu0 %688
    %v690 = vrcp.pop %v689
    %v691 = vmul.f32 %v686, %v690
    %v693 = vsel %vm192, %v691, 0
    %695 = vmatprep.subr.mxu0 %v34
    %696 = vmatpush1.msra.mxu0 %v33
    %697 = vmatprep.subr.mxu0 0.0
    %698 = vmatpush1.msra.mxu0 0.0
    %699 = vmatprep.subr.mxu0 0.0
    %700 = vmatpush1.msra.mxu0 0.0
    %701 = vmatprep.subr.mxu0 0.0
    %702 = vmatpush1.msra.mxu0 0.0
    %703 = vmatprep.subr.mxu0 0.0
    %704 = vmatpush1.msra.mxu0 0.0
    %705 = vmatprep.subr.mxu0 0.0
    %706 = vmatpush1.msra.mxu0 0.0
    %707 = vmatprep.subr.mxu0 0.0
    %708 = vmatpush1.msra.mxu0 0.0
    %709 = vmatprep.subr.mxu0 0.0
    %710 = vmatpush1.msra.mxu0 0.0
    %711 = vmatprep.subr.mxu0 0.0
    %712 = vmatpush1.msra.mxu0 0.0
    %713 = vmatprep.subr.mxu0 0.0
    %714 = vmatpush1.msra.mxu0 0.0
    %715 = vmatprep.subr.mxu0 0.0
    %716 = vmatpush1.msra.mxu0 0.0
    %717 = vmatprep.subr.mxu0 0.0
    %718 = vmatpush1.msra.mxu0 0.0
    %719 = vmatprep.subr.mxu0 0.0
    %720 = vmatpush1.msra.mxu0 0.0
    %721 = vmatprep.subr.mxu0 0.0
    %722 = vmatpush1.msra.mxu0 0.0
    %723 = vmatprep.subr.mxu0 0.0
    %724 = vmatpush1.msra.mxu0 0.0
    %725 = vmatprep.subr.mxu0 0.0
    %726 = vmatpush1.msra.mxu0 0.0
    %727 = vmatprep.subr.mxu0 0.0
    %728 = vmatpush1.msra.mxu0 0.0
    %729 = vmatprep.subr.mxu0 0.0
    %730 = vmatpush1.msra.mxu0 0.0
    %731 = vmatprep.subr.mxu0 0.0
    %732 = vmatpush1.msra.mxu0 0.0
    %733 = vmatprep.subr.mxu0 0.0
    %734 = vmatpush1.msra.mxu0 0.0
    %735 = vmatprep.subr.mxu0 0.0
    %736 = vmatpush1.msra.mxu0 0.0
    %737 = vmatprep.subr.mxu0 0.0
    %738 = vmatpush1.msra.mxu0 0.0
    %739 = vmatprep.subr.mxu0 0.0
    %740 = vmatpush1.msra.mxu0 0.0
    %741 = vmatprep.subr.mxu0 0.0
    %742 = vmatpush1.msra.mxu0 0.0
    %743 = vmatprep.subr.mxu0 0.0
    %744 = vmatpush1.msra.mxu0 0.0
    %745 = vmatprep.subr.mxu0 0.0
    %746 = vmatpush1.msra.mxu0 0.0
    %747 = vmatprep.subr.mxu0 0.0
    %748 = vmatpush1.msra.mxu0 0.0
    %749 = vmatprep.subr.mxu0 0.0
    %750 = vmatpush1.msra.mxu0 0.0
    %751 = vmatprep.subr.mxu0 0.0
    %752 = vmatpush1.msra.mxu0 0.0
    %753 = vmatprep.subr.mxu0 0.0
    %754 = vmatpush1.msra.mxu0 0.0
    %755 = vmatprep.subr.mxu0 0.0
    %756 = vmatpush1.msra.mxu0 0.0
    %757 = vmatprep.subr.mxu0 0.0
    %758 = vmatpush1.msra.mxu0 0.0
    %759 = vmatprep.mubr.f32.mxu0 0.0
    %760 = vmatmul.mubr.f32.gmra.mrb[0].mxu0 %v693
    %v761 = vpop.f32.mrb[0].mxu0
    %v762 = vadd.f32 0.0, %v761
    %v763 = vpop.f32.mrb[0].mxu0
    %v764 = vadd.f32 0.0, %v763
    %765 = vdwg.mxu0
    %s766 = scalar_lea.vmem %s3, 24
    %v767 = vld [vmem:[%s766] sm:$0xff]
    %s768 = scalar_lea.vmem %s4, 384
    %v769 = vld [vmem:[%s768] sm:$0xff]
    %v770 = vld [vmem:[%s768 + $0x8] sm:$0xff]
    %v771 = vld [vmem:[%s768 + $0x10] sm:$0xff]
    %v772 = vld [vmem:[%s768 + $0x18] sm:$0xff]
    %v773 = vld [vmem:[%s768 + $0x20] sm:$0xff]
    %v774 = vld [vmem:[%s768 + $0x28] sm:$0xff]
    %v775 = vld [vmem:[%s768 + $0x30] sm:$0xff]
    %v776 = vld [vmem:[%s768 + $0x38] sm:$0xff]
    %v777 = vld [vmem:[%s768 + $0x40] sm:$0xff]
    %v778 = vld [vmem:[%s768 + $0x48] sm:$0xff]
    %v779 = vld [vmem:[%s768 + $0x50] sm:$0xff]
    %v780 = vld [vmem:[%s768 + $0x58] sm:$0xff]
    %v781 = vld [vmem:[%s768 + $0x60] sm:$0xff]
    %v782 = vld [vmem:[%s768 + $0x68] sm:$0xff]
    %v783 = vld [vmem:[%s768 + $0x70] sm:$0xff]
    %v784 = vld [vmem:[%s768 + $0x78] sm:$0xff]
    %785 = vmatprep.subr.mxu0 0.0
    %786 = vmatpush1.msra.mxu0 %v769
    %787 = vmatprep.subr.mxu0 0.0
    %788 = vmatpush1.msra.mxu0 %v770
    %789 = vmatprep.subr.mxu0 0.0
    %790 = vmatpush1.msra.mxu0 %v771
    %791 = vmatprep.subr.mxu0 0.0
    %792 = vmatpush1.msra.mxu0 %v772
    %793 = vmatprep.subr.mxu0 0.0
    %794 = vmatpush1.msra.mxu0 %v773
    %795 = vmatprep.subr.mxu0 0.0
    %796 = vmatpush1.msra.mxu0 %v774
    %797 = vmatprep.subr.mxu0 0.0
    %798 = vmatpush1.msra.mxu0 %v775
    %799 = vmatprep.subr.mxu0 0.0
    %800 = vmatpush1.msra.mxu0 %v776
    %801 = vmatprep.subr.mxu0 0.0
    %802 = vmatpush1.msra.mxu0 %v777
    %803 = vmatprep.subr.mxu0 0.0
    %804 = vmatpush1.msra.mxu0 %v778
    %805 = vmatprep.subr.mxu0 0.0
    %806 = vmatpush1.msra.mxu0 %v779
    %807 = vmatprep.subr.mxu0 0.0
    %808 = vmatpush1.msra.mxu0 %v780
    %809 = vmatprep.subr.mxu0 0.0
    %810 = vmatpush1.msra.mxu0 %v781
    %811 = vmatprep.subr.mxu0 0.0
    %812 = vmatpush1.msra.mxu0 %v782
    %813 = vmatprep.subr.mxu0 0.0
    %814 = vmatpush1.msra.mxu0 %v783
    %815 = vmatprep.subr.mxu0 0.0
    %816 = vmatpush1.msra.mxu0 %v784
    %817 = vmatprep.subr.mxu0 0.0
    %818 = vmatpush1.msra.mxu0 0.0
    %819 = vmatprep.subr.mxu0 0.0
    %820 = vmatpush1.msra.mxu0 0.0
    %821 = vmatprep.subr.mxu0 0.0
    %822 = vmatpush1.msra.mxu0 0.0
    %823 = vmatprep.subr.mxu0 0.0
    %824 = vmatpush1.msra.mxu0 0.0
    %825 = vmatprep.subr.mxu0 0.0
    %826 = vmatpush1.msra.mxu0 0.0
    %827 = vmatprep.subr.mxu0 0.0
    %828 = vmatpush1.msra.mxu0 0.0
    %829 = vmatprep.subr.mxu0 0.0
    %830 = vmatpush1.msra.mxu0 0.0
    %831 = vmatprep.subr.mxu0 0.0
    %832 = vmatpush1.msra.mxu0 0.0
    %833 = vmatprep.subr.mxu0 0.0
    %834 = vmatpush1.msra.mxu0 0.0
    %835 = vmatprep.subr.mxu0 0.0
    %836 = vmatpush1.msra.mxu0 0.0
    %837 = vmatprep.subr.mxu0 0.0
    %838 = vmatpush1.msra.mxu0 0.0
    %839 = vmatprep.subr.mxu0 0.0
    %840 = vmatpush1.msra.mxu0 0.0
    %841 = vmatprep.subr.mxu0 0.0
    %842 = vmatpush1.msra.mxu0 0.0
    %843 = vmatprep.subr.mxu0 0.0
    %844 = vmatpush1.msra.mxu0 0.0
    %845 = vmatprep.subr.mxu0 0.0
    %846 = vmatpush1.msra.mxu0 0.0
    %847 = vmatprep.subr.mxu0 0.0
    %848 = vmatpush1.msra.mxu0 0.0
    %849 = vmatprep.mubr.f32.mxu0 0.0
    %850 = vmatmul.mubr.f32.gmra.mrb[0].mxu0 %v767
    %v851 = vpop.f32.mrb[0].mxu0
    %v852 = vadd.f32 0.0, %v851
    %v853 = vpop.f32.mrb[0].mxu0
    %854 = vdwg.mxu0
    %855 = vmatprep.subr.mxu0 0.0
    %856 = vmatpush1.xpose.msra.mxu0 %v32
    %857 = vmatprep.subr.mxu0 0.0
    %858 = vmatpush1.xpose.msra.mxu0 0.0
    %859 = vmatprep.subr.mxu0 0.0
    %860 = vmatpush1.xpose.msra.mxu0 0.0
    %861 = vmatprep.subr.mxu0 0.0
    %862 = vmatpush1.xpose.msra.mxu0 0.0
    %863 = vmatprep.subr.mxu0 0.0
    %864 = vmatpush1.xpose.msra.mxu0 0.0
    %865 = vmatprep.subr.mxu0 0.0
    %866 = vmatpush1.xpose.msra.mxu0 0.0
    %867 = vmatprep.subr.mxu0 0.0
    %868 = vmatpush1.xpose.msra.mxu0 0.0
    %869 = vmatprep.subr.mxu0 0.0
    %870 = vmatpush1.xpose.msra.mxu0 0.0
    %871 = vmatprep.subr.mxu0 0.0
    %872 = vmatpush1.xpose.msra.mxu0 0.0
    %873 = vmatprep.subr.mxu0 0.0
    %874 = vmatpush1.xpose.msra.mxu0 0.0
    %875 = vmatprep.subr.mxu0 0.0
    %876 = vmatpush1.xpose.msra.mxu0 0.0
    %877 = vmatprep.subr.mxu0 0.0
    %878 = vmatpush1.xpose.msra.mxu0 0.0
    %879 = vmatprep.subr.mxu0 0.0
    %880 = vmatpush1.xpose.msra.mxu0 0.0
    %881 = vmatprep.subr.mxu0 0.0
    %882 = vmatpush1.xpose.msra.mxu0 0.0
    %883 = vmatprep.subr.mxu0 0.0
    %884 = vmatpush1.xpose.msra.mxu0 0.0
    %885 = vmatprep.subr.mxu0 0.0
    %886 = vmatpush1.xpose.msra.mxu0 0.0
    %887 = vmatprep.subr.mxu0 0.0
    %888 = vmatpush1.xpose.msra.mxu0 0.0
    %889 = vmatprep.subr.mxu0 0.0
    %890 = vmatpush1.xpose.msra.mxu0 0.0
    %891 = vmatprep.subr.mxu0 0.0
    %892 = vmatpush1.xpose.msra.mxu0 0.0
    %893 = vmatprep.subr.mxu0 0.0
    %894 = vmatpush1.xpose.msra.mxu0 0.0
    %895 = vmatprep.subr.mxu0 0.0
    %896 = vmatpush1.xpose.msra.mxu0 0.0
    %897 = vmatprep.subr.mxu0 0.0
    %898 = vmatpush1.xpose.msra.mxu0 0.0
    %899 = vmatprep.subr.mxu0 0.0
    %900 = vmatpush1.xpose.msra.mxu0 0.0
    %901 = vmatprep.subr.mxu0 0.0
    %902 = vmatpush1.xpose.msra.mxu0 0.0
    %903 = vmatprep.subr.mxu0 0.0
    %904 = vmatpush1.xpose.msra.mxu0 0.0
    %905 = vmatprep.subr.mxu0 0.0
    %906 = vmatpush1.xpose.msra.mxu0 0.0
    %907 = vmatprep.subr.mxu0 0.0
    %908 = vmatpush1.xpose.msra.mxu0 0.0
    %909 = vmatprep.subr.mxu0 0.0
    %910 = vmatpush1.xpose.msra.mxu0 0.0
    %911 = vmatprep.subr.mxu0 0.0
    %912 = vmatpush1.xpose.msra.mxu0 0.0
    %913 = vmatprep.subr.mxu0 0.0
    %914 = vmatpush1.xpose.msra.mxu0 0.0
    %915 = vmatprep.subr.mxu0 0.0
    %916 = vmatpush1.xpose.msra.mxu0 0.0
    %917 = vmatprep.subr.mxu0 0.0
    %918 = vmatpush1.xpose.msra.mxu0 0.0
    %919 = vmatprep.mubr.f32.mxu0 0.0
    %920 = vmatmul.mubr.f32.gmra.mrb[0].mxu0 %v852
    %v921 = vpop.f32.mrb[0].mxu0
    %v922 = vadd.f32 0.0, %v921
    %v923 = vpop.f32.mrb[0].mxu0
    %924 = vdwg.mxu0
    %v925 = vsel %vm192, %v922, -inf
    %926 = vmax.xlane.f32.xlu0 %v925
    %v927 = vpop.xlane.xlu0 %926
    %v928 = vsub.f32 %v922, %v927
    %v929 = vmul.f32 %v928, 1.442695
    %v930 = vpow.pop %v929
    %v931 = vsel %vm192, %v930, 0.0
    %932 = vadd.xlane.f32.xlu0 %v931
    %v933 = vpop.xlane.xlu0 %932
    %v934 = vrcp.pop %v933
    %v935 = vmul.f32 %v930, %v934
    %v937 = vsel %vm192, %v935, 0
    %939 = vmatprep.subr.mxu0 %v34
    %940 = vmatpush1.msra.mxu0 %v33
    %941 = vmatprep.subr.mxu0 0.0
    %942 = vmatpush1.msra.mxu0 0.0
    %943 = vmatprep.subr.mxu0 0.0
    %944 = vmatpush1.msra.mxu0 0.0
    %945 = vmatprep.subr.mxu0 0.0
    %946 = vmatpush1.msra.mxu0 0.0
    %947 = vmatprep.subr.mxu0 0.0
    %948 = vmatpush1.msra.mxu0 0.0
    %949 = vmatprep.subr.mxu0 0.0
    %950 = vmatpush1.msra.mxu0 0.0
    %951 = vmatprep.subr.mxu0 0.0
    %952 = vmatpush1.msra.mxu0 0.0
    %953 = vmatprep.subr.mxu0 0.0
    %954 = vmatpush1.msra.mxu0 0.0
    %955 = vmatprep.subr.mxu0 0.0
    %956 = vmatpush1.msra.mxu0 0.0
    %957 = vmatprep.subr.mxu0 0.0
    %958 = vmatpush1.msra.mxu0 0.0
    %959 = vmatprep.subr.mxu0 0.0
    %960 = vmatpush1.msra.mxu0 0.0
    %961 = vmatprep.subr.mxu0 0.0
    %962 = vmatpush1.msra.mxu0 0.0
    %963 = vmatprep.subr.mxu0 0.0
    %964 = vmatpush1.msra.mxu0 0.0
    %965 = vmatprep.subr.mxu0 0.0
    %966 = vmatpush1.msra.mxu0 0.0
    %967 = vmatprep.subr.mxu0 0.0
    %968 = vmatpush1.msra.mxu0 0.0
    %969 = vmatprep.subr.mxu0 0.0
    %970 = vmatpush1.msra.mxu0 0.0
    %971 = vmatprep.subr.mxu0 0.0
    %972 = vmatpush1.msra.mxu0 0.0
    %973 = vmatprep.subr.mxu0 0.0
    %974 = vmatpush1.msra.mxu0 0.0
    %975 = vmatprep.subr.mxu0 0.0
    %976 = vmatpush1.msra.mxu0 0.0
    %977 = vmatprep.subr.mxu0 0.0
    %978 = vmatpush1.msra.mxu0 0.0
    %979 = vmatprep.subr.mxu0 0.0
    %980 = vmatpush1.msra.mxu0 0.0
    %981 = vmatprep.subr.mxu0 0.0
    %982 = vmatpush1.msra.mxu0 0.0
    %983 = vmatprep.subr.mxu0 0.0
    %984 = vmatpush1.msra.mxu0 0.0
    %985 = vmatprep.subr.mxu0 0.0
    %986 = vmatpush1.msra.mxu0 0.0
    %987 = vmatprep.subr.mxu0 0.0
    %988 = vmatpush1.msra.mxu0 0.0
    %989 = vmatprep.subr.mxu0 0.0
    %990 = vmatpush1.msra.mxu0 0.0
    %991 = vmatprep.subr.mxu0 0.0
    %992 = vmatpush1.msra.mxu0 0.0
    %993 = vmatprep.subr.mxu0 0.0
    %994 = vmatpush1.msra.mxu0 0.0
    %995 = vmatprep.subr.mxu0 0.0
    %996 = vmatpush1.msra.mxu0 0.0
    %997 = vmatprep.subr.mxu0 0.0
    %998 = vmatpush1.msra.mxu0 0.0
    %999 = vmatprep.subr.mxu0 0.0
    %1000 = vmatpush1.msra.mxu0 0.0
    %1001 = vmatprep.subr.mxu0 0.0
    %1002 = vmatpush1.msra.mxu0 0.0
    %1003 = vmatprep.mubr.f32.mxu0 0.0
    %1004 = vmatmul.mubr.f32.gmra.mrb[0].mxu0 %v937
    %v1005 = vpop.f32.mrb[0].mxu0
    %v1006 = vadd.f32 0.0, %v1005
    %v1007 = vpop.f32.mrb[0].mxu0
    %v1008 = vadd.f32 0.0, %v1007
    %1009 = vdwg.mxu0
    %v1010 = vld [vmem:[%s5] sm:$0xff]
    %v1011 = vld [vmem:[%s5 + $0x8] sm:$0xff]
    %v1012 = vld [vmem:[%s5 + $0x10] sm:$0xff]
    %v1013 = vld [vmem:[%s5 + $0x18] sm:$0xff]
    %v1014 = vld [vmem:[%s5 + $0x20] sm:$0xff]
    %v1015 = vld [vmem:[%s5 + $0x28] sm:$0xff]
    %v1016 = vld [vmem:[%s5 + $0x30] sm:$0xff]
    %v1017 = vld [vmem:[%s5 + $0x38] sm:$0xff]
    %v1018 = vld [vmem:[%s5 + $0x40] sm:$0xff]
    %v1019 = vld [vmem:[%s5 + $0x48] sm:$0xff]
    %v1020 = vld [vmem:[%s5 + $0x50] sm:$0xff]
    %v1021 = vld [vmem:[%s5 + $0x58] sm:$0xff]
    %v1022 = vld [vmem:[%s5 + $0x60] sm:$0xff]
    %v1023 = vld [vmem:[%s5 + $0x68] sm:$0xff]
    %v1024 = vld [vmem:[%s5 + $0x70] sm:$0xff]
    %v1025 = vld [vmem:[%s5 + $0x78] sm:$0xff]
    %v1026 = vld [vmem:[%s5 + $0x80] sm:$0xff]
    %v1027 = vld [vmem:[%s5 + $0x88] sm:$0xff]
    %v1028 = vld [vmem:[%s5 + $0x90] sm:$0xff]
    %v1029 = vld [vmem:[%s5 + $0x98] sm:$0xff]
    %v1030 = vld [vmem:[%s5 + $0xa0] sm:$0xff]
    %v1031 = vld [vmem:[%s5 + $0xa8] sm:$0xff]
    %v1032 = vld [vmem:[%s5 + $0xb0] sm:$0xff]
    %v1033 = vld [vmem:[%s5 + $0xb8] sm:$0xff]
    %v1034 = vld [vmem:[%s5 + $0xc0] sm:$0xff]
    %v1035 = vld [vmem:[%s5 + $0xc8] sm:$0xff]
    %v1036 = vld [vmem:[%s5 + $0xd0] sm:$0xff]
    %v1037 = vld [vmem:[%s5 + $0xd8] sm:$0xff]
    %v1038 = vld [vmem:[%s5 + $0xe0] sm:$0xff]
    %v1039 = vld [vmem:[%s5 + $0xe8] sm:$0xff]
    %v1040 = vld [vmem:[%s5 + $0xf0] sm:$0xff]
    %v1041 = vld [vmem:[%s5 + $0xf8] sm:$0xff]
    %v1042 = vld [vmem:[%s5 + $0x100] sm:$0xff]
    %v1043 = vld [vmem:[%s5 + $0x108] sm:$0xff]
    %v1044 = vld [vmem:[%s5 + $0x110] sm:$0xff]
    %v1045 = vld [vmem:[%s5 + $0x118] sm:$0xff]
    %v1046 = vld [vmem:[%s5 + $0x120] sm:$0xff]
    %v1047 = vld [vmem:[%s5 + $0x128] sm:$0xff]
    %v1048 = vld [vmem:[%s5 + $0x130] sm:$0xff]
    %v1049 = vld [vmem:[%s5 + $0x138] sm:$0xff]
    %v1050 = vld [vmem:[%s5 + $0x140] sm:$0xff]
    %v1051 = vld [vmem:[%s5 + $0x148] sm:$0xff]
    %v1052 = vld [vmem:[%s5 + $0x150] sm:$0xff]
    %v1053 = vld [vmem:[%s5 + $0x158] sm:$0xff]
    %v1054 = vld [vmem:[%s5 + $0x160] sm:$0xff]
    %v1055 = vld [vmem:[%s5 + $0x168] sm:$0xff]
    %v1056 = vld [vmem:[%s5 + $0x170] sm:$0xff]
    %v1057 = vld [vmem:[%s5 + $0x178] sm:$0xff]
    %v1058 = vld [vmem:[%s5 + $0x180] sm:$0xff]
    %v1059 = vld [vmem:[%s5 + $0x188] sm:$0xff]
    %v1060 = vld [vmem:[%s5 + $0x190] sm:$0xff]
    %v1061 = vld [vmem:[%s5 + $0x198] sm:$0xff]
    %v1062 = vld [vmem:[%s5 + $0x1a0] sm:$0xff]
    %v1063 = vld [vmem:[%s5 + $0x1a8] sm:$0xff]
    %v1064 = vld [vmem:[%s5 + $0x1b0] sm:$0xff]
    %v1065 = vld [vmem:[%s5 + $0x1b8] sm:$0xff]
    %v1066 = vld [vmem:[%s5 + $0x1c0] sm:$0xff]
    %v1067 = vld [vmem:[%s5 + $0x1c8] sm:$0xff]
    %v1068 = vld [vmem:[%s5 + $0x1d0] sm:$0xff]
    %v1069 = vld [vmem:[%s5 + $0x1d8] sm:$0xff]
    %v1070 = vld [vmem:[%s5 + $0x1e0] sm:$0xff]
    %v1071 = vld [vmem:[%s5 + $0x1e8] sm:$0xff]
    %v1072 = vld [vmem:[%s5 + $0x1f0] sm:$0xff]
    %v1073 = vld [vmem:[%s5 + $0x1f8] sm:$0xff]
    %v1074 = vld [vmem:[%s5 + $0x200] sm:$0xff]
    %v1075 = vld [vmem:[%s5 + $0x208] sm:$0xff]
    %v1076 = vld [vmem:[%s5 + $0x210] sm:$0xff]
    %v1077 = vld [vmem:[%s5 + $0x218] sm:$0xff]
    %v1078 = vld [vmem:[%s5 + $0x220] sm:$0xff]
    %v1079 = vld [vmem:[%s5 + $0x228] sm:$0xff]
    %v1080 = vld [vmem:[%s5 + $0x230] sm:$0xff]
    %v1081 = vld [vmem:[%s5 + $0x238] sm:$0xff]
    %v1082 = vld [vmem:[%s5 + $0x240] sm:$0xff]
    %v1083 = vld [vmem:[%s5 + $0x248] sm:$0xff]
    %v1084 = vld [vmem:[%s5 + $0x250] sm:$0xff]
    %v1085 = vld [vmem:[%s5 + $0x258] sm:$0xff]
    %v1086 = vld [vmem:[%s5 + $0x260] sm:$0xff]
    %v1087 = vld [vmem:[%s5 + $0x268] sm:$0xff]
    %v1088 = vld [vmem:[%s5 + $0x270] sm:$0xff]
    %v1089 = vld [vmem:[%s5 + $0x278] sm:$0xff]
    %v1090 = vld [vmem:[%s5 + $0x280] sm:$0xff]
    %v1091 = vld [vmem:[%s5 + $0x288] sm:$0xff]
    %v1092 = vld [vmem:[%s5 + $0x290] sm:$0xff]
    %v1093 = vld [vmem:[%s5 + $0x298] sm:$0xff]
    %v1094 = vld [vmem:[%s5 + $0x2a0] sm:$0xff]
    %v1095 = vld [vmem:[%s5 + $0x2a8] sm:$0xff]
    %v1096 = vld [vmem:[%s5 + $0x2b0] sm:$0xff]
    %v1097 = vld [vmem:[%s5 + $0x2b8] sm:$0xff]
    %v1098 = vld [vmem:[%s5 + $0x2c0] sm:$0xff]
    %v1099 = vld [vmem:[%s5 + $0x2c8] sm:$0xff]
    %v1100 = vld [vmem:[%s5 + $0x2d0] sm:$0xff]
    %v1101 = vld [vmem:[%s5 + $0x2d8] sm:$0xff]
    %v1102 = vld [vmem:[%s5 + $0x2e0] sm:$0xff]
    %v1103 = vld [vmem:[%s5 + $0x2e8] sm:$0xff]
    %v1104 = vld [vmem:[%s5 + $0x2f0] sm:$0xff]
    %v1105 = vld [vmem:[%s5 + $0x2f8] sm:$0xff]
    %v1106 = vld [vmem:[%s5 + $0x300] sm:$0xff]
    %v1107 = vld [vmem:[%s5 + $0x308] sm:$0xff]
    %v1108 = vld [vmem:[%s5 + $0x310] sm:$0xff]
    %v1109 = vld [vmem:[%s5 + $0x318] sm:$0xff]
    %v1110 = vld [vmem:[%s5 + $0x320] sm:$0xff]
    %v1111 = vld [vmem:[%s5 + $0x328] sm:$0xff]
    %v1112 = vld [vmem:[%s5 + $0x330] sm:$0xff]
    %v1113 = vld [vmem:[%s5 + $0x338] sm:$0xff]
    %v1114 = vld [vmem:[%s5 + $0x340] sm:$0xff]
    %v1115 = vld [vmem:[%s5 + $0x348] sm:$0xff]
    %v1116 = vld [vmem:[%s5 + $0x350] sm:$0xff]
    %v1117 = vld [vmem:[%s5 + $0x358] sm:$0xff]
    %v1118 = vld [vmem:[%s5 + $0x360] sm:$0xff]
    %v1119 = vld [vmem:[%s5 + $0x368] sm:$0xff]
    %v1120 = vld [vmem:[%s5 + $0x370] sm:$0xff]
    %v1121 = vld [vmem:[%s5 + $0x378] sm:$0xff]
    %v1122 = vld [vmem:[%s5 + $0x380] sm:$0xff]
    %v1123 = vld [vmem:[%s5 + $0x388] sm:$0xff]
    %v1124 = vld [vmem:[%s5 + $0x390] sm:$0xff]
    %v1125 = vld [vmem:[%s5 + $0x398] sm:$0xff]
    %v1126 = vld [vmem:[%s5 + $0x3a0] sm:$0xff]
    %v1127 = vld [vmem:[%s5 + $0x3a8] sm:$0xff]
    %v1128 = vld [vmem:[%s5 + $0x3b0] sm:$0xff]
    %v1129 = vld [vmem:[%s5 + $0x3b8] sm:$0xff]
    %v1130 = vld [vmem:[%s5 + $0x3c0] sm:$0xff]
    %v1131 = vld [vmem:[%s5 + $0x3c8] sm:$0xff]
    %v1132 = vld [vmem:[%s5 + $0x3d0] sm:$0xff]
    %v1133 = vld [vmem:[%s5 + $0x3d8] sm:$0xff]
    %v1134 = vld [vmem:[%s5 + $0x3e0] sm:$0xff]
    %v1135 = vld [vmem:[%s5 + $0x3e8] sm:$0xff]
    %v1136 = vld [vmem:[%s5 + $0x3f0] sm:$0xff]
    %v1137 = vld [vmem:[%s5 + $0x3f8] sm:$0xff]
    %v1138 = vld [vmem:[%s5 + $0x400] sm:$0xff]
    %v1139 = vld [vmem:[%s5 + $0x408] sm:$0xff]
    %v1140 = vld [vmem:[%s5 + $0x410] sm:$0xff]
    %v1141 = vld [vmem:[%s5 + $0x418] sm:$0xff]
    %v1142 = vld [vmem:[%s5 + $0x420] sm:$0xff]
    %v1143 = vld [vmem:[%s5 + $0x428] sm:$0xff]
    %v1144 = vld [vmem:[%s5 + $0x430] sm:$0xff]
    %v1145 = vld [vmem:[%s5 + $0x438] sm:$0xff]
    %v1146 = vld [vmem:[%s5 + $0x440] sm:$0xff]
    %v1147 = vld [vmem:[%s5 + $0x448] sm:$0xff]
    %v1148 = vld [vmem:[%s5 + $0x450] sm:$0xff]
    %v1149 = vld [vmem:[%s5 + $0x458] sm:$0xff]
    %v1150 = vld [vmem:[%s5 + $0x460] sm:$0xff]
    %v1151 = vld [vmem:[%s5 + $0x468] sm:$0xff]
    %v1152 = vld [vmem:[%s5 + $0x470] sm:$0xff]
    %v1153 = vld [vmem:[%s5 + $0x478] sm:$0xff]
    %v1154 = vld [vmem:[%s5 + $0x480] sm:$0xff]
    %v1155 = vld [vmem:[%s5 + $0x488] sm:$0xff]
    %v1156 = vld [vmem:[%s5 + $0x490] sm:$0xff]
    %v1157 = vld [vmem:[%s5 + $0x498] sm:$0xff]
    %v1158 = vld [vmem:[%s5 + $0x4a0] sm:$0xff]
    %v1159 = vld [vmem:[%s5 + $0x4a8] sm:$0xff]
    %v1160 = vld [vmem:[%s5 + $0x4b0] sm:$0xff]
    %v1161 = vld [vmem:[%s5 + $0x4b8] sm:$0xff]
    %v1162 = vld [vmem:[%s5 + $0x4c0] sm:$0xff]
    %v1163 = vld [vmem:[%s5 + $0x4c8] sm:$0xff]
    %v1164 = vld [vmem:[%s5 + $0x4d0] sm:$0xff]
    %v1165 = vld [vmem:[%s5 + $0x4d8] sm:$0xff]
    %v1166 = vld [vmem:[%s5 + $0x4e0] sm:$0xff]
    %v1167 = vld [vmem:[%s5 + $0x4e8] sm:$0xff]
    %v1168 = vld [vmem:[%s5 + $0x4f0] sm:$0xff]
    %v1169 = vld [vmem:[%s5 + $0x4f8] sm:$0xff]
    %v1170 = vld [vmem:[%s5 + $0x500] sm:$0xff]
    %v1171 = vld [vmem:[%s5 + $0x508] sm:$0xff]
    %v1172 = vld [vmem:[%s5 + $0x510] sm:$0xff]
    %v1173 = vld [vmem:[%s5 + $0x518] sm:$0xff]
    %v1174 = vld [vmem:[%s5 + $0x520] sm:$0xff]
    %v1175 = vld [vmem:[%s5 + $0x528] sm:$0xff]
    %v1176 = vld [vmem:[%s5 + $0x530] sm:$0xff]
    %v1177 = vld [vmem:[%s5 + $0x538] sm:$0xff]
    %v1178 = vld [vmem:[%s5 + $0x540] sm:$0xff]
    %v1179 = vld [vmem:[%s5 + $0x548] sm:$0xff]
    %v1180 = vld [vmem:[%s5 + $0x550] sm:$0xff]
    %v1181 = vld [vmem:[%s5 + $0x558] sm:$0xff]
    %v1182 = vld [vmem:[%s5 + $0x560] sm:$0xff]
    %v1183 = vld [vmem:[%s5 + $0x568] sm:$0xff]
    %v1184 = vld [vmem:[%s5 + $0x570] sm:$0xff]
    %v1185 = vld [vmem:[%s5 + $0x578] sm:$0xff]
    %v1186 = vld [vmem:[%s5 + $0x580] sm:$0xff]
    %v1187 = vld [vmem:[%s5 + $0x588] sm:$0xff]
    %v1188 = vld [vmem:[%s5 + $0x590] sm:$0xff]
    %v1189 = vld [vmem:[%s5 + $0x598] sm:$0xff]
    %v1190 = vld [vmem:[%s5 + $0x5a0] sm:$0xff]
    %v1191 = vld [vmem:[%s5 + $0x5a8] sm:$0xff]
    %v1192 = vld [vmem:[%s5 + $0x5b0] sm:$0xff]
    %v1193 = vld [vmem:[%s5 + $0x5b8] sm:$0xff]
    %v1194 = vld [vmem:[%s5 + $0x5c0] sm:$0xff]
    %v1195 = vld [vmem:[%s5 + $0x5c8] sm:$0xff]
    %v1196 = vld [vmem:[%s5 + $0x5d0] sm:$0xff]
    %v1197 = vld [vmem:[%s5 + $0x5d8] sm:$0xff]
    %v1198 = vld [vmem:[%s5 + $0x5e0] sm:$0xff]
    %v1199 = vld [vmem:[%s5 + $0x5e8] sm:$0xff]
    %v1200 = vld [vmem:[%s5 + $0x5f0] sm:$0xff]
    %v1201 = vld [vmem:[%s5 + $0x5f8] sm:$0xff]
    %v1202 = vld [vmem:[%s5 + $0x600] sm:$0xff]
    %v1203 = vld [vmem:[%s5 + $0x608] sm:$0xff]
    %v1204 = vld [vmem:[%s5 + $0x610] sm:$0xff]
    %v1205 = vld [vmem:[%s5 + $0x618] sm:$0xff]
    %v1206 = vld [vmem:[%s5 + $0x620] sm:$0xff]
    %v1207 = vld [vmem:[%s5 + $0x628] sm:$0xff]
    %v1208 = vld [vmem:[%s5 + $0x630] sm:$0xff]
    %v1209 = vld [vmem:[%s5 + $0x638] sm:$0xff]
    %v1210 = vld [vmem:[%s5 + $0x640] sm:$0xff]
    %v1211 = vld [vmem:[%s5 + $0x648] sm:$0xff]
    %v1212 = vld [vmem:[%s5 + $0x650] sm:$0xff]
    %v1213 = vld [vmem:[%s5 + $0x658] sm:$0xff]
    %v1214 = vld [vmem:[%s5 + $0x660] sm:$0xff]
    %v1215 = vld [vmem:[%s5 + $0x668] sm:$0xff]
    %v1216 = vld [vmem:[%s5 + $0x670] sm:$0xff]
    %v1217 = vld [vmem:[%s5 + $0x678] sm:$0xff]
    %v1218 = vld [vmem:[%s5 + $0x680] sm:$0xff]
    %v1219 = vld [vmem:[%s5 + $0x688] sm:$0xff]
    %v1220 = vld [vmem:[%s5 + $0x690] sm:$0xff]
    %v1221 = vld [vmem:[%s5 + $0x698] sm:$0xff]
    %v1222 = vld [vmem:[%s5 + $0x6a0] sm:$0xff]
    %v1223 = vld [vmem:[%s5 + $0x6a8] sm:$0xff]
    %v1224 = vld [vmem:[%s5 + $0x6b0] sm:$0xff]
    %v1225 = vld [vmem:[%s5 + $0x6b8] sm:$0xff]
    %v1226 = vld [vmem:[%s5 + $0x6c0] sm:$0xff]
    %v1227 = vld [vmem:[%s5 + $0x6c8] sm:$0xff]
    %v1228 = vld [vmem:[%s5 + $0x6d0] sm:$0xff]
    %v1229 = vld [vmem:[%s5 + $0x6d8] sm:$0xff]
    %v1230 = vld [vmem:[%s5 + $0x6e0] sm:$0xff]
    %v1231 = vld [vmem:[%s5 + $0x6e8] sm:$0xff]
    %v1232 = vld [vmem:[%s5 + $0x6f0] sm:$0xff]
    %v1233 = vld [vmem:[%s5 + $0x6f8] sm:$0xff]
    %v1234 = vld [vmem:[%s5 + $0x700] sm:$0xff]
    %v1235 = vld [vmem:[%s5 + $0x708] sm:$0xff]
    %v1236 = vld [vmem:[%s5 + $0x710] sm:$0xff]
    %v1237 = vld [vmem:[%s5 + $0x718] sm:$0xff]
    %v1238 = vld [vmem:[%s5 + $0x720] sm:$0xff]
    %v1239 = vld [vmem:[%s5 + $0x728] sm:$0xff]
    %v1240 = vld [vmem:[%s5 + $0x730] sm:$0xff]
    %v1241 = vld [vmem:[%s5 + $0x738] sm:$0xff]
    %v1242 = vld [vmem:[%s5 + $0x740] sm:$0xff]
    %v1243 = vld [vmem:[%s5 + $0x748] sm:$0xff]
    %v1244 = vld [vmem:[%s5 + $0x750] sm:$0xff]
    %v1245 = vld [vmem:[%s5 + $0x758] sm:$0xff]
    %v1246 = vld [vmem:[%s5 + $0x760] sm:$0xff]
    %v1247 = vld [vmem:[%s5 + $0x768] sm:$0xff]
    %v1248 = vld [vmem:[%s5 + $0x770] sm:$0xff]
    %v1249 = vld [vmem:[%s5 + $0x778] sm:$0xff]
    %v1250 = vld [vmem:[%s5 + $0x780] sm:$0xff]
    %v1251 = vld [vmem:[%s5 + $0x788] sm:$0xff]
    %v1252 = vld [vmem:[%s5 + $0x790] sm:$0xff]
    %v1253 = vld [vmem:[%s5 + $0x798] sm:$0xff]
    %v1254 = vld [vmem:[%s5 + $0x7a0] sm:$0xff]
    %v1255 = vld [vmem:[%s5 + $0x7a8] sm:$0xff]
    %v1256 = vld [vmem:[%s5 + $0x7b0] sm:$0xff]
    %v1257 = vld [vmem:[%s5 + $0x7b8] sm:$0xff]
    %v1258 = vld [vmem:[%s5 + $0x7c0] sm:$0xff]
    %v1259 = vld [vmem:[%s5 + $0x7c8] sm:$0xff]
    %v1260 = vld [vmem:[%s5 + $0x7d0] sm:$0xff]
    %v1261 = vld [vmem:[%s5 + $0x7d8] sm:$0xff]
    %v1262 = vld [vmem:[%s5 + $0x7e0] sm:$0xff]
    %v1263 = vld [vmem:[%s5 + $0x7e8] sm:$0xff]
    %v1264 = vld [vmem:[%s5 + $0x7f0] sm:$0xff]
    %v1265 = vld [vmem:[%s5 + $0x7f8] sm:$0xff]
    %1266 = vmatprep.subr.mxu0 %v1011
    %1267 = vmatpush1.msra.mxu0 %v1010
    %1268 = vmatprep.subr.mxu0 %v1013
    %1269 = vmatpush1.msra.mxu0 %v1012
    %1270 = vmatprep.subr.mxu0 %v1015
    %1271 = vmatpush1.msra.mxu0 %v1014
    %1272 = vmatprep.subr.mxu0 %v1017
    %1273 = vmatpush1.msra.mxu0 %v1016
    %1274 = vmatprep.subr.mxu0 %v1019
    %1275 = vmatpush1.msra.mxu0 %v1018
    %1276 = vmatprep.subr.mxu0 %v1021
    %1277 = vmatpush1.msra.mxu0 %v1020
    %1278 = vmatprep.subr.mxu0 %v1023
    %1279 = vmatpush1.msra.mxu0 %v1022
    %1280 = vmatprep.subr.mxu0 %v1025
    %1281 = vmatpush1.msra.mxu0 %v1024
    %1282 = vmatprep.subr.mxu0 %v1027
    %1283 = vmatpush1.msra.mxu0 %v1026
    %1284 = vmatprep.subr.mxu0 %v1029
    %1285 = vmatpush1.msra.mxu0 %v1028
    %1286 = vmatprep.subr.mxu0 %v1031
    %1287 = vmatpush1.msra.mxu0 %v1030
    %1288 = vmatprep.subr.mxu0 %v1033
    %1289 = vmatpush1.msra.mxu0 %v1032
    %1290 = vmatprep.subr.mxu0 %v1035
    %1291 = vmatpush1.msra.mxu0 %v1034
    %1292 = vmatprep.subr.mxu0 %v1037
    %1293 = vmatpush1.msra.mxu0 %v1036
    %1294 = vmatprep.subr.mxu0 %v1039
    %1295 = vmatpush1.msra.mxu0 %v1038
    %1296 = vmatprep.subr.mxu0 %v1041
    %1297 = vmatpush1.msra.mxu0 %v1040
    %1298 = vmatprep.subr.mxu0 %v1043
    %1299 = vmatpush1.msra.mxu0 %v1042
    %1300 = vmatprep.subr.mxu0 %v1045
    %1301 = vmatpush1.msra.mxu0 %v1044
    %1302 = vmatprep.subr.mxu0 %v1047
    %1303 = vmatpush1.msra.mxu0 %v1046
    %1304 = vmatprep.subr.mxu0 %v1049
    %1305 = vmatpush1.msra.mxu0 %v1048
    %1306 = vmatprep.subr.mxu0 %v1051
    %1307 = vmatpush1.msra.mxu0 %v1050
    %1308 = vmatprep.subr.mxu0 %v1053
    %1309 = vmatpush1.msra.mxu0 %v1052
    %1310 = vmatprep.subr.mxu0 %v1055
    %1311 = vmatpush1.msra.mxu0 %v1054
    %1312 = vmatprep.subr.mxu0 %v1057
    %1313 = vmatpush1.msra.mxu0 %v1056
    %1314 = vmatprep.subr.mxu0 %v1059
    %1315 = vmatpush1.msra.mxu0 %v1058
    %1316 = vmatprep.subr.mxu0 %v1061
    %1317 = vmatpush1.msra.mxu0 %v1060
    %1318 = vmatprep.subr.mxu0 %v1063
    %1319 = vmatpush1.msra.mxu0 %v1062
    %1320 = vmatprep.subr.mxu0 %v1065
    %1321 = vmatpush1.msra.mxu0 %v1064
    %1322 = vmatprep.subr.mxu0 %v1067
    %1323 = vmatpush1.msra.mxu0 %v1066
    %1324 = vmatprep.subr.mxu0 %v1069
    %1325 = vmatpush1.msra.mxu0 %v1068
    %1326 = vmatprep.subr.mxu0 %v1071
    %1327 = vmatpush1.msra.mxu0 %v1070
    %1328 = vmatprep.subr.mxu0 %v1073
    %1329 = vmatpush1.msra.mxu0 %v1072
    %1330 = vmatprep.mubr.f32.mxu0 %v276
    %1331 = vmatmul.mubr.f32.gmra.mrb[0].mxu0 %v274
    %v1332 = vpop.f32.mrb[0].mxu0
    %v1333 = vadd.f32 0.0, %v1332
    %v1334 = vpop.f32.mrb[0].mxu0
    %v1335 = vadd.f32 0.0, %v1334
    %1336 = vdwg.mxu0
    %1337 = vmatprep.subr.mxu0 %v1075
    %1338 = vmatpush1.msra.mxu0 %v1074
    %1339 = vmatprep.subr.mxu0 %v1077
    %1340 = vmatpush1.msra.mxu0 %v1076
    %1341 = vmatprep.subr.mxu0 %v1079
    %1342 = vmatpush1.msra.mxu0 %v1078
    %1343 = vmatprep.subr.mxu0 %v1081
    %1344 = vmatpush1.msra.mxu0 %v1080
    %1345 = vmatprep.subr.mxu0 %v1083
    %1346 = vmatpush1.msra.mxu0 %v1082
    %1347 = vmatprep.subr.mxu0 %v1085
    %1348 = vmatpush1.msra.mxu0 %v1084
    %1349 = vmatprep.subr.mxu0 %v1087
    %1350 = vmatpush1.msra.mxu0 %v1086
    %1351 = vmatprep.subr.mxu0 %v1089
    %1352 = vmatpush1.msra.mxu0 %v1088
    %1353 = vmatprep.subr.mxu0 %v1091
    %1354 = vmatpush1.msra.mxu0 %v1090
    %1355 = vmatprep.subr.mxu0 %v1093
    %1356 = vmatpush1.msra.mxu0 %v1092
    %1357 = vmatprep.subr.mxu0 %v1095
    %1358 = vmatpush1.msra.mxu0 %v1094
    %1359 = vmatprep.subr.mxu0 %v1097
    %1360 = vmatpush1.msra.mxu0 %v1096
    %1361 = vmatprep.subr.mxu0 %v1099
    %1362 = vmatpush1.msra.mxu0 %v1098
    %1363 = vmatprep.subr.mxu0 %v1101
    %1364 = vmatpush1.msra.mxu0 %v1100
    %1365 = vmatprep.subr.mxu0 %v1103
    %1366 = vmatpush1.msra.mxu0 %v1102
    %1367 = vmatprep.subr.mxu0 %v1105
    %1368 = vmatpush1.msra.mxu0 %v1104
    %1369 = vmatprep.subr.mxu0 %v1107
    %1370 = vmatpush1.msra.mxu0 %v1106
    %1371 = vmatprep.subr.mxu0 %v1109
    %1372 = vmatpush1.msra.mxu0 %v1108
    %1373 = vmatprep.subr.mxu0 %v1111
    %1374 = vmatpush1.msra.mxu0 %v1110
    %1375 = vmatprep.subr.mxu0 %v1113
    %1376 = vmatpush1.msra.mxu0 %v1112
    %1377 = vmatprep.subr.mxu0 %v1115
    %1378 = vmatpush1.msra.mxu0 %v1114
    %1379 = vmatprep.subr.mxu0 %v1117
    %1380 = vmatpush1.msra.mxu0 %v1116
    %1381 = vmatprep.subr.mxu0 %v1119
    %1382 = vmatpush1.msra.mxu0 %v1118
    %1383 = vmatprep.subr.mxu0 %v1121
    %1384 = vmatpush1.msra.mxu0 %v1120
    %1385 = vmatprep.subr.mxu0 %v1123
    %1386 = vmatpush1.msra.mxu0 %v1122
    %1387 = vmatprep.subr.mxu0 %v1125
    %1388 = vmatpush1.msra.mxu0 %v1124
    %1389 = vmatprep.subr.mxu0 %v1127
    %1390 = vmatpush1.msra.mxu0 %v1126
    %1391 = vmatprep.subr.mxu0 %v1129
    %1392 = vmatpush1.msra.mxu0 %v1128
    %1393 = vmatprep.subr.mxu0 %v1131
    %1394 = vmatpush1.msra.mxu0 %v1130
    %1395 = vmatprep.subr.mxu0 %v1133
    %1396 = vmatpush1.msra.mxu0 %v1132
    %1397 = vmatprep.subr.mxu0 %v1135
    %1398 = vmatpush1.msra.mxu0 %v1134
    %1399 = vmatprep.subr.mxu0 %v1137
    %1400 = vmatpush1.msra.mxu0 %v1136
    %1401 = vmatprep.mubr.f32.mxu0 %v520
    %1402 = vmatmul.mubr.f32.gmra.mrb[0].mxu0 %v518
    %v1403 = vpop.f32.mrb[0].mxu0
    %v1404 = vadd.f32 %v1333, %v1403
    %v1405 = vpop.f32.mrb[0].mxu0
    %v1406 = vadd.f32 %v1335, %v1405
    %1407 = vdwg.mxu0
    %1408 = vmatprep.subr.mxu0 %v1139
    %1409 = vmatpush1.msra.mxu0 %v1138
    %1410 = vmatprep.subr.mxu0 %v1141
    %1411 = vmatpush1.msra.mxu0 %v1140
    %1412 = vmatprep.subr.mxu0 %v1143
    %1413 = vmatpush1.msra.mxu0 %v1142
    %1414 = vmatprep.subr.mxu0 %v1145
    %1415 = vmatpush1.msra.mxu0 %v1144
    %1416 = vmatprep.subr.mxu0 %v1147
    %1417 = vmatpush1.msra.mxu0 %v1146
    %1418 = vmatprep.subr.mxu0 %v1149
    %1419 = vmatpush1.msra.mxu0 %v1148
    %1420 = vmatprep.subr.mxu0 %v1151
    %1421 = vmatpush1.msra.mxu0 %v1150
    %1422 = vmatprep.subr.mxu0 %v1153
    %1423 = vmatpush1.msra.mxu0 %v1152
    %1424 = vmatprep.subr.mxu0 %v1155
    %1425 = vmatpush1.msra.mxu0 %v1154
    %1426 = vmatprep.subr.mxu0 %v1157
    %1427 = vmatpush1.msra.mxu0 %v1156
    %1428 = vmatprep.subr.mxu0 %v1159
    %1429 = vmatpush1.msra.mxu0 %v1158
    %1430 = vmatprep.subr.mxu0 %v1161
    %1431 = vmatpush1.msra.mxu0 %v1160
    %1432 = vmatprep.subr.mxu0 %v1163
    %1433 = vmatpush1.msra.mxu0 %v1162
    %1434 = vmatprep.subr.mxu0 %v1165
    %1435 = vmatpush1.msra.mxu0 %v1164
    %1436 = vmatprep.subr.mxu0 %v1167
    %1437 = vmatpush1.msra.mxu0 %v1166
    %1438 = vmatprep.subr.mxu0 %v1169
    %1439 = vmatpush1.msra.mxu0 %v1168
    %1440 = vmatprep.subr.mxu0 %v1171
    %1441 = vmatpush1.msra.mxu0 %v1170
    %1442 = vmatprep.subr.mxu0 %v1173
    %1443 = vmatpush1.msra.mxu0 %v1172
    %1444 = vmatprep.subr.mxu0 %v1175
    %1445 = vmatpush1.msra.mxu0 %v1174
    %1446 = vmatprep.subr.mxu0 %v1177
    %1447 = vmatpush1.msra.mxu0 %v1176
    %1448 = vmatprep.subr.mxu0 %v1179
    %1449 = vmatpush1.msra.mxu0 %v1178
    %1450 = vmatprep.subr.mxu0 %v1181
    %1451 = vmatpush1.msra.mxu0 %v1180
    %1452 = vmatprep.subr.mxu0 %v1183
    %1453 = vmatpush1.msra.mxu0 %v1182
    %1454 = vmatprep.subr.mxu0 %v1185
    %1455 = vmatpush1.msra.mxu0 %v1184
    %1456 = vmatprep.subr.mxu0 %v1187
    %1457 = vmatpush1.msra.mxu0 %v1186
    %1458 = vmatprep.subr.mxu0 %v1189
    %1459 = vmatpush1.msra.mxu0 %v1188
    %1460 = vmatprep.subr.mxu0 %v1191
    %1461 = vmatpush1.msra.mxu0 %v1190
    %1462 = vmatprep.subr.mxu0 %v1193
    %1463 = vmatpush1.msra.mxu0 %v1192
    %1464 = vmatprep.subr.mxu0 %v1195
    %1465 = vmatpush1.msra.mxu0 %v1194
    %1466 = vmatprep.subr.mxu0 %v1197
    %1467 = vmatpush1.msra.mxu0 %v1196
    %1468 = vmatprep.subr.mxu0 %v1199
    %1469 = vmatpush1.msra.mxu0 %v1198
    %1470 = vmatprep.subr.mxu0 %v1201
    %1471 = vmatpush1.msra.mxu0 %v1200
    %1472 = vmatprep.mubr.f32.mxu0 %v764
    %1473 = vmatmul.mubr.f32.gmra.mrb[0].mxu0 %v762
    %v1474 = vpop.f32.mrb[0].mxu0
    %v1475 = vadd.f32 %v1404, %v1474
    %v1476 = vpop.f32.mrb[0].mxu0
    %v1477 = vadd.f32 %v1406, %v1476
    %1478 = vdwg.mxu0
    %1479 = vmatprep.subr.mxu0 %v1203
    %1480 = vmatpush1.msra.mxu0 %v1202
    %1481 = vmatprep.subr.mxu0 %v1205
    %1482 = vmatpush1.msra.mxu0 %v1204
    %1483 = vmatprep.subr.mxu0 %v1207
    %1484 = vmatpush1.msra.mxu0 %v1206
    %1485 = vmatprep.subr.mxu0 %v1209
    %1486 = vmatpush1.msra.mxu0 %v1208
    %1487 = vmatprep.subr.mxu0 %v1211
    %1488 = vmatpush1.msra.mxu0 %v1210
    %1489 = vmatprep.subr.mxu0 %v1213
    %1490 = vmatpush1.msra.mxu0 %v1212
    %1491 = vmatprep.subr.mxu0 %v1215
    %1492 = vmatpush1.msra.mxu0 %v1214
    %1493 = vmatprep.subr.mxu0 %v1217
    %1494 = vmatpush1.msra.mxu0 %v1216
    %1495 = vmatprep.subr.mxu0 %v1219
    %1496 = vmatpush1.msra.mxu0 %v1218
    %1497 = vmatprep.subr.mxu0 %v1221
    %1498 = vmatpush1.msra.mxu0 %v1220
    %1499 = vmatprep.subr.mxu0 %v1223
    %1500 = vmatpush1.msra.mxu0 %v1222
    %1501 = vmatprep.subr.mxu0 %v1225
    %1502 = vmatpush1.msra.mxu0 %v1224
    %1503 = vmatprep.subr.mxu0 %v1227
    %1504 = vmatpush1.msra.mxu0 %v1226
    %1505 = vmatprep.subr.mxu0 %v1229
    %1506 = vmatpush1.msra.mxu0 %v1228
    %1507 = vmatprep.subr.mxu0 %v1231
    %1508 = vmatpush1.msra.mxu0 %v1230
    %1509 = vmatprep.subr.mxu0 %v1233
    %1510 = vmatpush1.msra.mxu0 %v1232
    %1511 = vmatprep.subr.mxu0 %v1235
    %1512 = vmatpush1.msra.mxu0 %v1234
    %1513 = vmatprep.subr.mxu0 %v1237
    %1514 = vmatpush1.msra.mxu0 %v1236
    %1515 = vmatprep.subr.mxu0 %v1239
    %1516 = vmatpush1.msra.mxu0 %v1238
    %1517 = vmatprep.subr.mxu0 %v1241
    %1518 = vmatpush1.msra.mxu0 %v1240
    %1519 = vmatprep.subr.mxu0 %v1243
    %1520 = vmatpush1.msra.mxu0 %v1242
    %1521 = vmatprep.subr.mxu0 %v1245
    %1522 = vmatpush1.msra.mxu0 %v1244
    %1523 = vmatprep.subr.mxu0 %v1247
    %1524 = vmatpush1.msra.mxu0 %v1246
    %1525 = vmatprep.subr.mxu0 %v1249
    %1526 = vmatpush1.msra.mxu0 %v1248
    %1527 = vmatprep.subr.mxu0 %v1251
    %1528 = vmatpush1.msra.mxu0 %v1250
    %1529 = vmatprep.subr.mxu0 %v1253
    %1530 = vmatpush1.msra.mxu0 %v1252
    %1531 = vmatprep.subr.mxu0 %v1255
    %1532 = vmatpush1.msra.mxu0 %v1254
    %1533 = vmatprep.subr.mxu0 %v1257
    %1534 = vmatpush1.msra.mxu0 %v1256
    %1535 = vmatprep.subr.mxu0 %v1259
    %1536 = vmatpush1.msra.mxu0 %v1258
    %1537 = vmatprep.subr.mxu0 %v1261
    %1538 = vmatpush1.msra.mxu0 %v1260
    %1539 = vmatprep.subr.mxu0 %v1263
    %1540 = vmatpush1.msra.mxu0 %v1262
    %1541 = vmatprep.subr.mxu0 %v1265
    %1542 = vmatpush1.msra.mxu0 %v1264
    %1543 = vmatprep.mubr.f32.mxu0 %v1008
    %1544 = vmatmul.mubr.f32.gmra.mrb[0].mxu0 %v1006
    %v1545 = vpop.f32.mrb[0].mxu0
    %v1546 = vadd.f32 %v1475, %v1545
    %v1547 = vpop.f32.mrb[0].mxu0
    %v1548 = vadd.f32 %v1477, %v1547
    %1549 = vdwg.mxu0
    %v1550 = vld [vmem:[%s0] sm:$0xff]
    %v1551 = vld [vmem:[%s0 + $0x8] sm:$0xff]
    %v1552 = vadd.f32 %v1550, %v1546
    %v1553 = vadd.f32 %v1551, %v1548
    %v1555 = vlaneseq
    %v1556 = vshrl.u32 %v1555, 7
    %v1557 = vsub.s32 0, %v1556
    %v1558 = vrot.slane %v27, %v1557
    %v1559 = vlaneseq
    %v1560 = vshrl.u32 %v1559, 7
    %v1561 = vsub.s32 1, %v1560
    %v1562 = vrot.slane %v27, %v1561
    %v1565 = vadd.f32 %v1552, %v1558
    %v1566 = vadd.f32 %v1553, %v1562
    %vm1567 = vcmask 261120
    %v1568 = vsel %vm1567, %v1566, 0.0
    %v1569 = vadd.f32 %v1565, %v1568
    %1570 = vadd.xlane.f32.xlu0 %v1569
    %v1571 = vpop.xlane.xlu0 %1570
    %v1572 = vrcp.pop 160.0
    %v1573 = vmul.f32 %v1571, %v1572
    %v1574 = vsub.f32 %v1565, %v1573
    %v1575 = vsub.f32 %v1566, %v1573
    %v1576 = vmul.f32 %v1574, %v1574
    %v1577 = vmul.f32 %v1575, %v1575
    %v1578 = vsel %vm1567, %v1577, 0.0
    %v1579 = vadd.f32 %v1576, %v1578
    %1580 = vadd.xlane.f32.xlu0 %v1579
    %v1581 = vpop.xlane.xlu0 %1580
    %v1582 = vmul.f32 %v1581, %v1572
    %v1583 = vadd.f32 %v1582, 160.0
    %v1584 = vrsqrt.pop %v1583
    %v1585 = vmul.f32 %v1574, %v1584
    %v1586 = vmul.f32 %v1575, %v1584
    %v1588 = vlaneseq
    %v1589 = vshrl.u32 %v1588, 7
    %v1590 = vsub.s32 0, %v1589
    %v1591 = vrot.slane %v29, %v1590
    %v1592 = vlaneseq
    %v1593 = vshrl.u32 %v1592, 7
    %v1594 = vsub.s32 1, %v1593
    %v1595 = vrot.slane %v29, %v1594
    %v1598 = vmul.f32 %v1585, %v1591
    %v1599 = vmul.f32 %v1586, %v1595
    %v1601 = vlaneseq
    %v1602 = vshrl.u32 %v1601, 7
    %v1603 = vsub.s32 0, %v1602
    %v1604 = vrot.slane %v31, %v1603
    %v1605 = vlaneseq
    %v1606 = vshrl.u32 %v1605, 7
    %v1607 = vsub.s32 1, %v1606
    %v1608 = vrot.slane %v31, %v1607
    %v1611 = vadd.f32 %v1598, %v1604
    %v1612 = vadd.f32 %v1599, %v1608
    %1613 = vst [vmem:[#allocation2] sm:$0xff] %v1611
    %1614 = vst.msk [vmem:[#allocation2 + $0x8] sm:$0xff] %vm1567, %v1612
    // Predicated region
    $region30: #{tpu_custom_call.1} parent=1 // pred_check
      _
    $region31: #{tpu_custom_call.1} parent=1 // pred_check_branch
      %1616 = sbr.rel (0) target = $region33
    $region32: #{tpu_custom_call.1} parent=1 // pred_region
      %s1618 = ssub.s32 256, 256
      %1619 = vsyncadd [#allocation3], %s1618
      %s1621 = sshll.u32 [#allocation2], 4
      %s1622 = int_to_ptr.vmem [resolvable:$true] %s1621
      %1624 = dma.vmem_to_hbm [thread:$0]  %s1622, 256, %s7, [#allocation3]
    $region33: #{tpu_custom_call.1} parent=1 // pred_fallthru
      _
    // Predicated region
    $region34: #{tpu_custom_call.1} parent=1 // pred_check
      _
    $region35: #{tpu_custom_call.1} parent=1 // pred_check_branch
      %1626 = sbr.rel (0) target = $region37
    $region36: #{tpu_custom_call.1} parent=1 // pred_region
      %1627 = dma.done [#allocation3], 256
    $region37: #{tpu_custom_call.1} parent=1 // pred_fallthru
      _
    %1628 = vsyncpa [#allocation3], 1

</llo_original>
